<compile_context>
chip_gen: v5e
topology: v5e:2x2
jax: 0.10.0
libtpu: 0.0.40
codegen_flags: <defaults>
</compile_context>

<pallas_src>
import functools

import jax
import jax.numpy as jnp
from jax.experimental import pallas as pl
from jax.experimental.pallas import tpu as pltpu  # noqa: F401  (default full-array VMEM placement)

# ---------------- model dimensions (args equivalents) ----------------
NUM_GRAPHS = 8        # len(graphs) == num_nodes of the graph-of-graphs
NODES_PER_GRAPH = 8   # nodes in each molecular graph
NUM_FEATURES = 16     # num_features
GCN_DIM = 32          # first_gcn_dimensions == second_gcn_dimensions (required by SAGE wiring)
DENSE1 = 16           # first_dense_neurons
DENSE2 = 2            # second_dense_neurons (must be 2: MSE against torch.ones(2))
VGAE_HIDDEN = 64      # vgae_hidden_dimensions (lin3 is unused by forward)

LANES = 128           # packed-slab lane width / output row width


# ====================== fused Pallas kernel ======================

def _dvgga_fused_kernel(dims, al_ref, x_ref, w_ref, aux_ref, out_ref):
    """Entire DVGGA forward in one VMEM-resident invocation (no grid)."""
    f32 = jnp.float32
    G, N, F, D, H, C = dims["G"], dims["N"], dims["F"], dims["D"], dims["H"], dims["C"]
    E, EP = dims["E"], dims["EP"]
    o = dims["W_OFFS"]
    GN, D2, D4 = G * N, 2 * D, 4 * D

    def mm(a, b):
        return jnp.dot(a, b, preferred_element_type=f32)

    # -------- unpack packed operands (static VMEM slices, no extra DMAs) -----
    a_bd = al_ref[0:GN, :]                                   # block-diag gcn_norm(A)
    l_bd = al_ref[GN:2 * GN, :]                              # block-diag sym Laplacian
    w_gcn = w_ref[o[0]:o[0] + F, 0:D]
    w_fc1 = w_ref[o[1]:o[1] + D, 0:H]
    w_fc2 = w_ref[o[2]:o[2] + H, 0:C]
    vw1 = w_ref[o[3]:o[3] + D, 0:D2]
    vw_ml = w_ref[o[4]:o[4] + D2, 0:D2]                      # [conv_mu | conv_logstd]
    lw_top = w_ref[o[5]:o[5] + D, 0:D4]                      # [lin1 | lin2] rows hit by emb.weight
    lw_bot = w_ref[o[6]:o[6] + D, 0:D4]                      # [lin1 | lin2] rows hit by z
    b_gcn = aux_ref[0:1, 0:D]
    b_fc1 = aux_ref[1:2, 0:H]
    b_fc2 = aux_ref[2:3, 0:C]
    vb1 = aux_ref[3:4, 0:D2]
    b_ml = aux_ref[4:5, 0:D2]                                # [b_mu | b_logstd]
    lb = aux_ref[5:6, 0:D4]                                  # [lin1_b | lin2_b]
    embw = aux_ref[8:8 + G, 0:D]                             # self.emb.weight
    adj_gg = aux_ref[8:8 + G, D:D + G]                       # dense gcn_norm(pos_edges)
    src_t = aux_ref[8:8 + G, D + G:D + G + E]                # one_hot(source)^T  (G, E)
    tgt_t = aux_ref[8:8 + G, D + G + E:D + G + 2 * E]        # one_hot(target)^T  (G, E)

    # -------- SAGE (all graphs at once, block-diagonal adjacency) ------------
    xw = mm(x_ref[...], w_gcn)                               # (GN, D)
    nf = mm(a_bd, xw) + b_gcn                                # GCNConv            (GN, D)
    h = jnp.tanh(mm(nf, w_fc1) + b_fc1)                      # fc1 + tanh         (GN, H)
    logits = mm(h, w_fc2) + b_fc2                            # fc2                (GN, 2)
    # softmax over 2 classes == sigmoid of the logit difference (no cross-lane
    # max/sum reductions on a 2-of-128-lane vreg).
    d01 = logits[:, 0:1] - logits[:, 1:2]
    p0 = 1.0 / (1.0 + jnp.exp(-d01))                         # (GN, 1)
    p1 = 1.0 - p0
    assign = jnp.concatenate([p0, p1], axis=1)               # (GN, 2)

    la = mm(l_bd, assign)                                    # L @ assignment     (GN, 2)
    q0 = la[:, 0:1]
    q1 = la[:, 1:2]

    # per-graph pooling matrix: poolf[k, r] = 1 iff flat row r belongs to graph k
    gg = jax.lax.broadcasted_iota(jnp.int32, (G, GN), 0)
    rr = jax.lax.broadcasted_iota(jnp.int32, (G, GN), 1)
    poolf = ((rr >= gg * N) & (rr < (gg + 1) * N)).astype(f32)

    # One pooling matmul produces the per-graph graph embedding AND the four
    # entries of new_adj_g = assign_g^T @ L_g @ assign_g (2x2 per graph).
    stacked = jnp.concatenate([nf, p0 * q0, p1 * q1, p0 * q1, p1 * q0], axis=1)  # (GN, D+4)
    pooled = mm(poolf, stacked)                                                   # (G, D+4)
    # graph_embedding = mean over the 2 cluster rows of assign^T @ nf; softmax
    # rows sum to 1 exactly here, so this is 0.5 * per-graph sum of nf rows.
    embs = 0.5 * pooled[:, 0:D]                                                   # (G, D)
    # TODO(synk): nn.Dropout(args.dropout) on the stacked embeddings treated as identity (eval).
    d00 = pooled[:, D:D + 1]
    d11 = pooled[:, D + 1:D + 2]
    a01 = pooled[:, D + 2:D + 3]
    a10 = pooled[:, D + 3:D + 4]
    # F.normalize(new_adj, p=1, dim=1): diag / max(row L1 norm, 1e-12)
    nd0 = d00 * pl.reciprocal(jnp.maximum(jnp.abs(d00) + jnp.abs(a01), 1e-12), approx=True)
    nd1 = d11 * pl.reciprocal(jnp.maximum(jnp.abs(d11) + jnp.abs(a10), 1e-12), approx=True)
    # pos_penalty = MSE(diag, torch.ones(2)) per graph; DVGGA averages over graphs.
    pen = 0.5 * ((nd0 - 1.0) ** 2 + (nd1 - 1.0) ** 2)        # (G, 1)
    positive_penalty = jnp.mean(pen, keepdims=True)          # (1, 1)

    # -------- VGAE VariationalGCNEncoder.encode ------------------------------
    def gcn_prop(y):
        return mm(adj_gg, y)                                 # D^-1/2 (A+I) D^-1/2 @ y

    h1 = jnp.maximum(gcn_prop(mm(embs, vw1)) + vb1, 0.0)     # conv1 + relu       (G, 2D)
    # TODO(synk): nn.Dropout(p=0.3) between conv1 and conv_mu/conv_logstd treated as identity (eval).
    muls = gcn_prop(mm(h1, vw_ml)) + b_ml                    # [mu | logstd]      (G, 2D)
    mu = muls[:, 0:D]
    ls = jnp.minimum(muls[:, D:D2], 10.0)                    # MAX_LOGSTD clamp
    z = mu  # TODO(synk): VGAE.reparametrize gaussian noise omitted (deterministic / eval path).

    # kl_loss = -0.5 * mean(sum(1 + 2*logstd - mu^2 - exp(2*logstd), dim=1))
    kl_row = jnp.sum(1.0 + 2.0 * ls - mu * mu - jnp.exp(2.0 * ls),
                     axis=1, keepdims=True)                  # (G, 1)
    kl = -0.5 * jnp.mean(kl_row, keepdims=True)              # (1, 1)

    # -------- unsupervised edge prediction ------------------------------------
    # lin1/lin2 on cat([emb.weight, z], -1); both linears computed with ONE pair
    # of matmuls via the horizontally concatenated weights.
    m12 = mm(embw, lw_top) + mm(z, lw_bot) + lb              # (G, 4D) = [lin1(rows) | lin2(rows)]
    m1 = m12[:, 0:D2]                                        # lin1 of every graph row
    m2 = m12[:, D2:D4]                                       # lin2 of every graph row
    # score[e] = m1[src[e]] . m2[dst[e]]  ->  S = m1 @ m2^T, then one-hot selects,
    # produced directly as a lane-dense (1, E) row (no column output / transpose).
    s_mat = jax.lax.dot_general(m1, m2, (((1,), (1,)), ((), ())),
                                preferred_element_type=f32)  # (G, G)
    scores = jnp.sum(src_t * mm(s_mat, tgt_t), axis=0, keepdims=True)   # (1, E)
    preds = pl.reciprocal(1.0 + jnp.exp(-scores), approx=True)          # sigmoid
    preds = jnp.minimum(preds, 1.0)                          # guard log(1 - p + eps) against approx overshoot

    eps = 1e-15
    rec_loss = (-jnp.mean(jnp.log(preds[:, 0:EP] + eps), keepdims=True)
                - jnp.mean(jnp.log(1.0 - preds[:, EP:E] + eps), keepdims=True))   # (1, 1)
    pre_loss = rec_loss + kl / G                             # kl_loss = (1/num_graphs) * vgae.kl_loss()

    # -------- single lane-dense packed output row -----------------------------
    pad = jnp.zeros((1, out_ref.shape[1] - E - 2), f32)
    out_ref[...] = jnp.concatenate([preds, pre_loss, positive_penalty, pad], axis=1)


# ====================== JAX glue (graph / parameter preprocessing) ======================

def gcn_norm_dense(edge_index, edge_weight, num_nodes):
    """PyG gcn_norm as a dense matrix: D_hat^-1/2 (A + I) D_hat^-1/2, A[target, source]."""
    src, dst = edge_index[0], edge_index[1]
    a = jnp.zeros((num_nodes, num_nodes), jnp.float32).at[dst, src].add(edge_weight)
    a = a + jnp.eye(num_nodes, dtype=jnp.float32)      # self loops, weight 1
    deg = jnp.sum(a, axis=1)
    dis = jnp.where(deg > 0.0, 1.0 / jnp.sqrt(deg), 0.0)
    return dis[:, None] * a * dis[None, :]


def sym_laplacian_dense(edge_index, edge_weight, num_nodes):
    """get_laplacian(..., normalization='sym') densified: I - D^-1/2 A D^-1/2 (no self loops)."""
    row, col = edge_index[0], edge_index[1]
    a = jnp.zeros((num_nodes, num_nodes), jnp.float32).at[row, col].add(edge_weight)
    deg = jnp.sum(a, axis=1)
    dis = jnp.where(deg > 0.0, 1.0 / jnp.sqrt(deg), 0.0)
    return jnp.eye(num_nodes, dtype=jnp.float32) - dis[:, None] * a * dis[None, :]


def _block_diag(mats):
    """(G, N, N) per-graph matrices -> (G*N, G*N) block-diagonal matrix."""
    G, N, _ = mats.shape
    eye_g = jnp.eye(G, dtype=mats.dtype)
    bd = eye_g[:, None, :, None] * mats[:, :, None, :]   # bd[g,i,h,j] = eye[g,h]*m[g,i,j]
    return bd.reshape(G * N, G * N)


def _pack_rows(mats, lanes):
    """Stack 2-D matrices into one (rows, lanes) f32 slab; each matrix starts at an
    8-aligned row, lanes are zero-padded.  Returns (slab, row_offsets)."""
    offs, r = [], 0
    for m in mats:
        r = -(-r // 8) * 8
        offs.append(r)
        r += m.shape[0]
    rows = -(-r // 8) * 8
    slab = jnp.zeros((rows, lanes), jnp.float32)
    for off, m in zip(offs, mats):
        slab = slab.at[off:off + m.shape[0], 0:m.shape[1]].set(m.astype(jnp.float32))
    return slab, tuple(offs)


# ====================== DVGGA forward ======================

def dvgga_forward(a_norm, l_mat, x_graphs, pos_edges, neg_edges,
                  sage_params, vgae_params, lin1_w, lin1_b, lin2_w, lin2_b, emb_weight):
    G, N, _ = a_norm.shape
    F = x_graphs.shape[-1]
    D = sage_params["w_gcn"].shape[1]
    H = sage_params["w_fc1"].shape[1]
    C = sage_params["w_fc2"].shape[1]
    EP = pos_edges.shape[1]
    EN = neg_edges.shape[1]
    E = EP + EN
    GN = G * N
    assert C == 2, "second_dense_neurons must be 2 (MSE against torch.ones(2))"
    assert D + G + 2 * E <= LANES and E + 2 <= LANES and 4 * D <= LANES

    # ---- block-diagonal A / L packing -> single matmul per GCN layer in kernel
    a_bd = _block_diag(a_norm)
    l_bd = _block_diag(l_mat)
    al_bd = jnp.concatenate([a_bd, l_bd], axis=0)                        # (2*GN, GN)
    x_flat = x_graphs.reshape(GN, F).astype(jnp.float32)                 # (GN, F)

    # ---- graph-of-graphs preprocessing (edge lists -> dense structures) ------
    adj_gg = gcn_norm_dense(pos_edges, jnp.ones((EP,), jnp.float32), G)  # (G, G)
    src_all = jnp.concatenate([pos_edges[0], neg_edges[0]]).astype(jnp.int32)
    dst_all = jnp.concatenate([pos_edges[1], neg_edges[1]]).astype(jnp.int32)
    gid = jnp.arange(G, dtype=jnp.int32)[:, None]
    src_t = (src_all[None, :] == gid).astype(jnp.float32)                # (G, E)
    tgt_t = (dst_all[None, :] == gid).astype(jnp.float32)                # (G, E)

    # ---- pack all weight matrices into one lane-padded slab (one DMA) --------
    vw_ml = jnp.concatenate([vgae_params["wmu"], vgae_params["wls"]], axis=1)   # (2D, 2D)
    lw_top = jnp.concatenate([lin1_w[:D], lin2_w[:D]], axis=1)                  # (D, 4D)
    lw_bot = jnp.concatenate([lin1_w[D:], lin2_w[D:]], axis=1)                  # (D, 4D)
    wslab, w_offs = _pack_rows(
        [sage_params["w_gcn"], sage_params["w_fc1"], sage_params["w_fc2"],
         vgae_params["w1"], vw_ml, lw_top, lw_bot], LANES)

    # ---- pack biases / emb.weight / adjacency / one-hots into one aux slab ----
    b_ml = jnp.concatenate([vgae_params["bmu"], vgae_params["bls"]], axis=1)    # (1, 2D)
    lb = jnp.concatenate([lin1_b, lin2_b], axis=1)                              # (1, 4D)
    aux = jnp.zeros((8 + G, LANES), jnp.float32)
    aux = aux.at[0:1, 0:D].set(sage_params["b_gcn"])
    aux = aux.at[1:2, 0:H].set(sage_params["b_fc1"])
    aux = aux.at[2:3, 0:C].set(sage_params["b_fc2"])
    aux = aux.at[3:4, 0:2 * D].set(vgae_params["b1"])
    aux = aux.at[4:5, 0:2 * D].set(b_ml)
    aux = aux.at[5:6, 0:4 * D].set(lb)
    aux = aux.at[8:8 + G, 0:D].set(emb_weight)
    aux = aux.at[8:8 + G, D:D + G].set(adj_gg)
    aux = aux.at[8:8 + G, D + G:D + G + E].set(src_t)
    aux = aux.at[8:8 + G, D + G + E:D + G + 2 * E].set(tgt_t)

    dims = dict(G=G, N=N, F=F, D=D, H=H, C=C, E=E, EP=EP, W_OFFS=w_offs)

    out = pl.pallas_call(
        functools.partial(_dvgga_fused_kernel, dims),
        out_shape=jax.ShapeDtypeStruct((1, LANES), jnp.float32),
    )(al_bd, x_flat, wslab, aux)

    preds = out[0, :E]
    pre_loss = out[0, E]
    positive_penalty = out[0, E + 1]
    return pre_loss, positive_penalty, preds[:EP], preds[EP:]


# ====================== main ======================

if __name__ == "__main__":
    key = jax.random.PRNGKey(0)
    keys = jax.random.split(key, 16)

    G, N, F = NUM_GRAPHS, NODES_PER_GRAPH, NUM_FEATURES
    D, H, C = GCN_DIM, DENSE1, DENSE2

    # --- synthetic per-graph data: undirected weighted rings (no isolated nodes) ---
    # TODO(synk): the contains_isolated_nodes / remove_isolated_nodes branch of SAGE is not
    # implemented; inputs are constructed without isolated nodes so that branch is a no-op.
    ring = jnp.arange(N)
    src = jnp.concatenate([ring, (ring + 1) % N])
    dst = jnp.concatenate([(ring + 1) % N, ring])
    edge_index_g = jnp.stack([src, dst])                          # (2, 2N) same topology per graph

    x_graphs = jax.random.normal(keys[0], (G, N, F), jnp.float32)
    w_undir = jax.random.uniform(keys[1], (G, N), jnp.float32, 0.5, 1.5)
    edge_w_graphs = jnp.concatenate([w_undir, w_undir], axis=1)   # symmetric edge weights

    a_norm = jax.vmap(lambda w: gcn_norm_dense(edge_index_g, w, N))(edge_w_graphs)
    l_mat = jax.vmap(lambda w: sym_laplacian_dense(edge_index_g, w, N))(edge_w_graphs)

    # --- graph-of-graphs edges ---
    gr = jnp.arange(G)
    pos_edges = jnp.stack([jnp.concatenate([gr, (gr + 1) % G]),
                           jnp.concatenate([(gr + 1) % G, gr])])  # (2, 2G)
    neg_edges = jax.random.randint(keys[2], (2, 2 * G), 0, G)     # provided -> no negative_sampling

    # --- deterministic parameters (stored as (in, out): kernel computes x @ W + b) ---
    def winit(k, shape, scale=0.1):
        return scale * jax.random.normal(k, shape, jnp.float32)

    sage_params = dict(
        w_gcn=winit(keys[3], (F, D)), b_gcn=winit(keys[4], (1, D)),
        w_fc1=winit(keys[5], (D, H)), b_fc1=winit(keys[6], (1, H)),
        w_fc2=winit(keys[7], (H, C)), b_fc2=winit(keys[8], (1, C)),
    )
    vgae_params = dict(
        w1=winit(keys[9], (D, 2 * D)), b1=winit(keys[10], (1, 2 * D)),
        wmu=winit(keys[11], (2 * D, D)), bmu=jnp.zeros((1, D), jnp.float32),
        wls=winit(keys[12], (2 * D, D)), bls=jnp.zeros((1, D), jnp.float32),
    )
    lin1_w = winit(keys[13], (2 * D, 2 * D))
    lin1_b = jnp.zeros((1, 2 * D), jnp.float32)
    lin2_w = winit(keys[14], (2 * D, 2 * D))
    lin2_b = jnp.zeros((1, 2 * D), jnp.float32)
    emb_weight = winit(keys[15], (G, D), scale=1.0)               # self.emb.weight

    fwd = jax.jit(dvgga_forward)
    pre_loss, positive_penalty, pos_pred, neg_pred = fwd(
        a_norm, l_mat, x_graphs, pos_edges, neg_edges,
        sage_params, vgae_params, lin1_w, lin1_b, lin2_w, lin2_b, emb_weight)

    jax.block_until_ready((pre_loss, positive_penalty, pos_pred, neg_pred))
    print("KERNEL_OK")
</pallas_src>

<mosaic_0001>
module attributes {stable_mosaic.version = 11 : i64} {
  func.func @_dvgga_fused_kernel(%arg0: memref<128x64xf32, #tpu.memory_space<vmem>>, %arg1: memref<64x16xf32, #tpu.memory_space<vmem>>, %arg2: memref<224x128xf32, #tpu.memory_space<vmem>>, %arg3: memref<16x128xf32, #tpu.memory_space<vmem>>, %arg4: memref<1x128xf32, #tpu.memory_space<vmem>>) attributes {dimension_semantics = [], scalar_prefetch = 0 : i64, scratch_operands = 0 : i64, tpu.core_type = #tpu.core_type<tc>} {
    %c0 = arith.constant 0 : index
    %c0_0 = arith.constant 0 : index
    %0 = vector.load %arg0[%c0, %c0_0] : memref<128x64xf32, #tpu.memory_space<vmem>>, vector<64x64xf32>
    %c64 = arith.constant 64 : index
    %c0_1 = arith.constant 0 : index
    %1 = vector.load %arg0[%c64, %c0_1] : memref<128x64xf32, #tpu.memory_space<vmem>>, vector<64x64xf32>
    %c0_2 = arith.constant 0 : index
    %c0_3 = arith.constant 0 : index
    %2 = vector.load %arg2[%c0_2, %c0_3] : memref<224x128xf32, #tpu.memory_space<vmem>>, vector<16x32xf32>
    %c16 = arith.constant 16 : index
    %c0_4 = arith.constant 0 : index
    %3 = vector.load %arg2[%c16, %c0_4] : memref<224x128xf32, #tpu.memory_space<vmem>>, vector<32x16xf32>
    %c48 = arith.constant 48 : index
    %c0_5 = arith.constant 0 : index
    %4 = vector.load %arg2[%c48, %c0_5] : memref<224x128xf32, #tpu.memory_space<vmem>>, vector<16x2xf32>
    %c64_6 = arith.constant 64 : index
    %c0_7 = arith.constant 0 : index
    %5 = vector.load %arg2[%c64_6, %c0_7] : memref<224x128xf32, #tpu.memory_space<vmem>>, vector<32x64xf32>
    %c96 = arith.constant 96 : index
    %c0_8 = arith.constant 0 : index
    %6 = vector.load %arg2[%c96, %c0_8] : memref<224x128xf32, #tpu.memory_space<vmem>>, vector<64x64xf32>
    %c160 = arith.constant 160 : index
    %c0_9 = arith.constant 0 : index
    %7 = vector.load %arg2[%c160, %c0_9] : memref<224x128xf32, #tpu.memory_space<vmem>>, vector<32x128xf32>
    %c192 = arith.constant 192 : index
    %c0_10 = arith.constant 0 : index
    %8 = vector.load %arg2[%c192, %c0_10] : memref<224x128xf32, #tpu.memory_space<vmem>>, vector<32x128xf32>
    %c0_11 = arith.constant 0 : index
    %c0_12 = arith.constant 0 : index
    %9 = vector.load %arg3[%c0_11, %c0_12] : memref<16x128xf32, #tpu.memory_space<vmem>>, vector<1x32xf32>
    %c1 = arith.constant 1 : index
    %c0_13 = arith.constant 0 : index
    %10 = vector.load %arg3[%c1, %c0_13] : memref<16x128xf32, #tpu.memory_space<vmem>>, vector<1x16xf32>
    %c2 = arith.constant 2 : index
    %c0_14 = arith.constant 0 : index
    %11 = vector.load %arg3[%c2, %c0_14] : memref<16x128xf32, #tpu.memory_space<vmem>>, vector<1x2xf32>
    %c3 = arith.constant 3 : index
    %c0_15 = arith.constant 0 : index
    %12 = vector.load %arg3[%c3, %c0_15] : memref<16x128xf32, #tpu.memory_space<vmem>>, vector<1x64xf32>
    %c4 = arith.constant 4 : index
    %c0_16 = arith.constant 0 : index
    %13 = vector.load %arg3[%c4, %c0_16] : memref<16x128xf32, #tpu.memory_space<vmem>>, vector<1x64xf32>
    %c5 = arith.constant 5 : index
    %c0_17 = arith.constant 0 : index
    %14 = vector.load %arg3[%c5, %c0_17] : memref<16x128xf32, #tpu.memory_space<vmem>>, vector<1x128xf32>
    %c8 = arith.constant 8 : index
    %c0_18 = arith.constant 0 : index
    %15 = vector.load %arg3[%c8, %c0_18] : memref<16x128xf32, #tpu.memory_space<vmem>>, vector<8x32xf32>
    %c8_19 = arith.constant 8 : index
    %c32 = arith.constant 32 : index
    %16 = vector.load %arg3[%c8_19, %c32] : memref<16x128xf32, #tpu.memory_space<vmem>>, vector<8x8xf32>
    %c8_20 = arith.constant 8 : index
    %c40 = arith.constant 40 : index
    %17 = vector.load %arg3[%c8_20, %c40] : memref<16x128xf32, #tpu.memory_space<vmem>>, vector<8x32xf32>
    %c8_21 = arith.constant 8 : index
    %c72 = arith.constant 72 : index
    %18 = vector.load %arg3[%c8_21, %c72] : memref<16x128xf32, #tpu.memory_space<vmem>>, vector<8x32xf32>
    %c0_22 = arith.constant 0 : index
    %c0_23 = arith.constant 0 : index
    %19 = vector.load %arg1[%c0_22, %c0_23] : memref<64x16xf32, #tpu.memory_space<vmem>>, vector<64x16xf32>
    %cst = arith.constant dense<0.000000e+00> : vector<64x32xf32>
    %20 = tpu.matmul %19, %2, %cst {dimension_numbers = #tpu.dot_dimension_numbers<[1], [0], [0], [1], [0, 0, 1, 1], [], []>} : vector<64x16xf32>, vector<16x32xf32>, vector<64x32xf32> -> vector<64x32xf32>
    %cst_24 = arith.constant dense<0.000000e+00> : vector<64x32xf32>
    %21 = tpu.matmul %0, %20, %cst_24 {dimension_numbers = #tpu.dot_dimension_numbers<[1], [0], [0], [1], [0, 0, 1, 1], [], []>} : vector<64x64xf32>, vector<64x32xf32>, vector<64x32xf32> -> vector<64x32xf32>
    %22 = vector.broadcast %9 : vector<1x32xf32> to vector<64x32xf32>
    %23 = arith.addf %21, %22 : vector<64x32xf32>
    %cst_25 = arith.constant dense<0.000000e+00> : vector<64x16xf32>
    %24 = tpu.matmul %23, %3, %cst_25 {dimension_numbers = #tpu.dot_dimension_numbers<[1], [0], [0], [1], [0, 0, 1, 1], [], []>} : vector<64x32xf32>, vector<32x16xf32>, vector<64x16xf32> -> vector<64x16xf32>
    %25 = vector.broadcast %10 : vector<1x16xf32> to vector<64x16xf32>
    %26 = arith.addf %24, %25 : vector<64x16xf32>
    %27 = math.tanh %26 : vector<64x16xf32>
    %cst_26 = arith.constant dense<0.000000e+00> : vector<64x2xf32>
    %28 = tpu.matmul %27, %4, %cst_26 {dimension_numbers = #tpu.dot_dimension_numbers<[1], [0], [0], [1], [0, 0, 1, 1], [], []>} : vector<64x16xf32>, vector<16x2xf32>, vector<64x2xf32> -> vector<64x2xf32>
    %29 = vector.broadcast %11 : vector<1x2xf32> to vector<64x2xf32>
    %30 = arith.addf %28, %29 : vector<64x2xf32>
    %31 = vector.extract_strided_slice %30 {offsets = [0, 0], sizes = [64, 1], strides = [1, 1]} : vector<64x2xf32> to vector<64x1xf32>
    %32 = vector.extract_strided_slice %30 {offsets = [0, 1], sizes = [64, 1], strides = [1, 1]} : vector<64x2xf32> to vector<64x1xf32>
    %33 = arith.subf %31, %32 : vector<64x1xf32>
    %cst_27 = arith.constant 0.000000e+00 : f32
    %34 = vector.broadcast %cst_27 : f32 to vector<64x1xf32>
    %35 = arith.subf %34, %33 : vector<64x1xf32>
    %36 = math.exp %35 : vector<64x1xf32>
    %cst_28 = arith.constant 1.000000e+00 : f32
    %37 = vector.broadcast %cst_28 : f32 to vector<64x1xf32>
    %38 = arith.addf %37, %36 : vector<64x1xf32>
    %cst_29 = arith.constant 1.000000e+00 : f32
    %39 = vector.broadcast %cst_29 : f32 to vector<64x1xf32>
    %40 = arith.divf %39, %38 : vector<64x1xf32>
    %cst_30 = arith.constant 1.000000e+00 : f32
    %41 = vector.broadcast %cst_30 : f32 to vector<64x1xf32>
    %42 = arith.subf %41, %40 : vector<64x1xf32>
    %43 = tpu.concatenate %40, %42 in 1 : vector<64x1xf32>, vector<64x1xf32> -> vector<64x2xf32>
    %cst_31 = arith.constant dense<0.000000e+00> : vector<64x2xf32>
    %44 = tpu.matmul %1, %43, %cst_31 {dimension_numbers = #tpu.dot_dimension_numbers<[1], [0], [0], [1], [0, 0, 1, 1], [], []>} : vector<64x64xf32>, vector<64x2xf32>, vector<64x2xf32> -> vector<64x2xf32>
    %45 = vector.extract_strided_slice %44 {offsets = [0, 0], sizes = [64, 1], strides = [1, 1]} : vector<64x2xf32> to vector<64x1xf32>
    %46 = vector.extract_strided_slice %44 {offsets = [0, 1], sizes = [64, 1], strides = [1, 1]} : vector<64x2xf32> to vector<64x1xf32>
    %47 = tpu.iota {dimensions = array<i32: 0>} : vector<8x64xi32>
    %48 = tpu.iota {dimensions = array<i32: 1>} : vector<8x64xi32>
    %c8_i32 = arith.constant 8 : i32
    %49 = vector.broadcast %c8_i32 : i32 to vector<8x64xi32>
    %50 = arith.muli %47, %49 : vector<8x64xi32>
    %51 = arith.cmpi sge, %48, %50 : vector<8x64xi32>
    %c1_i32 = arith.constant 1 : i32
    %52 = vector.broadcast %c1_i32 : i32 to vector<8x64xi32>
    %53 = arith.addi %47, %52 : vector<8x64xi32>
    %c8_i32_32 = arith.constant 8 : i32
    %54 = vector.broadcast %c8_i32_32 : i32 to vector<8x64xi32>
    %55 = arith.muli %53, %54 : vector<8x64xi32>
    %56 = arith.cmpi slt, %48, %55 : vector<8x64xi32>
    %57 = arith.andi %51, %56 : vector<8x64xi1>
    %58 = arith.extui %57 : vector<8x64xi1> to vector<8x64xi32>
    %59 = arith.sitofp %58 : vector<8x64xi32> to vector<8x64xf32>
    %60 = arith.mulf %40, %45 : vector<64x1xf32>
    %61 = arith.mulf %42, %46 : vector<64x1xf32>
    %62 = arith.mulf %40, %46 : vector<64x1xf32>
    %63 = arith.mulf %42, %45 : vector<64x1xf32>
    %64 = tpu.concatenate %23, %60, %61, %62, %63 in 1 : vector<64x32xf32>, vector<64x1xf32>, vector<64x1xf32>, vector<64x1xf32>, vector<64x1xf32> -> vector<64x36xf32>
    %cst_33 = arith.constant dense<0.000000e+00> : vector<8x36xf32>
    %65 = tpu.matmul %59, %64, %cst_33 {dimension_numbers = #tpu.dot_dimension_numbers<[1], [0], [0], [1], [0, 0, 1, 1], [], []>} : vector<8x64xf32>, vector<64x36xf32>, vector<8x36xf32> -> vector<8x36xf32>
    %66 = vector.extract_strided_slice %65 {offsets = [0, 0], sizes = [8, 32], strides = [1, 1]} : vector<8x36xf32> to vector<8x32xf32>
    %cst_34 = arith.constant 5.000000e-01 : f32
    %67 = vector.broadcast %cst_34 : f32 to vector<8x32xf32>
    %68 = arith.mulf %67, %66 : vector<8x32xf32>
    %69 = vector.extract_strided_slice %65 {offsets = [0, 32], sizes = [8, 1], strides = [1, 1]} : vector<8x36xf32> to vector<8x1xf32>
    %70 = vector.extract_strided_slice %65 {offsets = [0, 33], sizes = [8, 1], strides = [1, 1]} : vector<8x36xf32> to vector<8x1xf32>
    %71 = vector.extract_strided_slice %65 {offsets = [0, 34], sizes = [8, 1], strides = [1, 1]} : vector<8x36xf32> to vector<8x1xf32>
    %72 = vector.extract_strided_slice %65 {offsets = [0, 35], sizes = [8, 1], strides = [1, 1]} : vector<8x36xf32> to vector<8x1xf32>
    %73 = math.absf %69 : vector<8x1xf32>
    %74 = math.absf %71 : vector<8x1xf32>
    %75 = arith.addf %73, %74 : vector<8x1xf32>
    %cst_35 = arith.constant 9.99999996E-13 : f32
    %76 = vector.broadcast %cst_35 : f32 to vector<8x1xf32>
    %77 = arith.maximumf %75, %76 : vector<8x1xf32>
    %78 = tpu.reciprocal %77 {approx = true} : vector<8x1xf32> -> vector<8x1xf32>
    %79 = arith.mulf %69, %78 : vector<8x1xf32>
    %80 = math.absf %70 : vector<8x1xf32>
    %81 = math.absf %72 : vector<8x1xf32>
    %82 = arith.addf %80, %81 : vector<8x1xf32>
    %cst_36 = arith.constant 9.99999996E-13 : f32
    %83 = vector.broadcast %cst_36 : f32 to vector<8x1xf32>
    %84 = arith.maximumf %82, %83 : vector<8x1xf32>
    %85 = tpu.reciprocal %84 {approx = true} : vector<8x1xf32> -> vector<8x1xf32>
    %86 = arith.mulf %70, %85 : vector<8x1xf32>
    %cst_37 = arith.constant 1.000000e+00 : f32
    %87 = vector.broadcast %cst_37 : f32 to vector<8x1xf32>
    %88 = arith.subf %79, %87 : vector<8x1xf32>
    %89 = arith.mulf %88, %88 : vector<8x1xf32>
    %cst_38 = arith.constant 1.000000e+00 : f32
    %90 = vector.broadcast %cst_38 : f32 to vector<8x1xf32>
    %91 = arith.subf %86, %90 : vector<8x1xf32>
    %92 = arith.mulf %91, %91 : vector<8x1xf32>
    %93 = arith.addf %89, %92 : vector<8x1xf32>
    %cst_39 = arith.constant 5.000000e-01 : f32
    %94 = vector.broadcast %cst_39 : f32 to vector<8x1xf32>
    %95 = arith.mulf %94, %93 : vector<8x1xf32>
    %96 = vector.shape_cast %95 : vector<8x1xf32> to vector<1x8x1xf32>
    %cst_40 = arith.constant dense<0.000000e+00> : vector<1xf32>
    %97 = vector.multi_reduction <add>, %96, %cst_40 [1, 2] : vector<1x8x1xf32> to vector<1xf32>
    %98 = vector.shape_cast %97 : vector<1xf32> to vector<1x1x1xf32>
    %99 = vector.extract %98[0, 0, 0] : f32 from vector<1x1x1xf32>
    %100 = vector.broadcast %99 : f32 to vector<1x1xf32>
    %cst_41 = arith.constant 8.000000e+00 : f32
    %101 = vector.broadcast %cst_41 : f32 to vector<1x1xf32>
    %102 = arith.divf %100, %101 : vector<1x1xf32>
    %cst_42 = arith.constant dense<0.000000e+00> : vector<8x64xf32>
    %103 = tpu.matmul %68, %5, %cst_42 {dimension_numbers = #tpu.dot_dimension_numbers<[1], [0], [0], [1], [0, 0, 1, 1], [], []>} : vector<8x32xf32>, vector<32x64xf32>, vector<8x64xf32> -> vector<8x64xf32>
    %cst_43 = arith.constant dense<0.000000e+00> : vector<8x64xf32>
    %104 = tpu.matmul %16, %103, %cst_43 {dimension_numbers = #tpu.dot_dimension_numbers<[1], [0], [0], [1], [0, 0, 1, 1], [], []>} : vector<8x8xf32>, vector<8x64xf32>, vector<8x64xf32> -> vector<8x64xf32>
    %105 = vector.broadcast %12 : vector<1x64xf32> to vector<8x64xf32>
    %106 = arith.addf %104, %105 : vector<8x64xf32>
    %cst_44 = arith.constant 0.000000e+00 : f32
    %107 = vector.broadcast %cst_44 : f32 to vector<8x64xf32>
    %108 = arith.maximumf %106, %107 : vector<8x64xf32>
    %cst_45 = arith.constant dense<0.000000e+00> : vector<8x64xf32>
    %109 = tpu.matmul %108, %6, %cst_45 {dimension_numbers = #tpu.dot_dimension_numbers<[1], [0], [0], [1], [0, 0, 1, 1], [], []>} : vector<8x64xf32>, vector<64x64xf32>, vector<8x64xf32> -> vector<8x64xf32>
    %cst_46 = arith.constant dense<0.000000e+00> : vector<8x64xf32>
    %110 = tpu.matmul %16, %109, %cst_46 {dimension_numbers = #tpu.dot_dimension_numbers<[1], [0], [0], [1], [0, 0, 1, 1], [], []>} : vector<8x8xf32>, vector<8x64xf32>, vector<8x64xf32> -> vector<8x64xf32>
    %111 = vector.broadcast %13 : vector<1x64xf32> to vector<8x64xf32>
    %112 = arith.addf %110, %111 : vector<8x64xf32>
    %113 = vector.extract_strided_slice %112 {offsets = [0, 0], sizes = [8, 32], strides = [1, 1]} : vector<8x64xf32> to vector<8x32xf32>
    %114 = vector.extract_strided_slice %112 {offsets = [0, 32], sizes = [8, 32], strides = [1, 1]} : vector<8x64xf32> to vector<8x32xf32>
    %cst_47 = arith.constant 1.000000e+01 : f32
    %115 = vector.broadcast %cst_47 : f32 to vector<8x32xf32>
    %116 = arith.minimumf %114, %115 : vector<8x32xf32>
    %cst_48 = arith.constant 2.000000e+00 : f32
    %117 = vector.broadcast %cst_48 : f32 to vector<8x32xf32>
    %118 = arith.mulf %117, %116 : vector<8x32xf32>
    %cst_49 = arith.constant 1.000000e+00 : f32
    %119 = vector.broadcast %cst_49 : f32 to vector<8x32xf32>
    %120 = arith.addf %119, %118 : vector<8x32xf32>
    %121 = arith.mulf %113, %113 : vector<8x32xf32>
    %122 = arith.subf %120, %121 : vector<8x32xf32>
    %cst_50 = arith.constant 2.000000e+00 : f32
    %123 = vector.broadcast %cst_50 : f32 to vector<8x32xf32>
    %124 = arith.mulf %123, %116 : vector<8x32xf32>
    %125 = math.exp %124 : vector<8x32xf32>
    %126 = arith.subf %122, %125 : vector<8x32xf32>
    %cst_51 = arith.constant dense<0.000000e+00> : vector<8xf32>
    %127 = vector.multi_reduction <add>, %126, %cst_51 [1] : vector<8x32xf32> to vector<8xf32>
    %128 = vector.shape_cast %127 : vector<8xf32> to vector<8x1xf32>
    %129 = vector.shape_cast %128 : vector<8x1xf32> to vector<1x8x1xf32>
    %cst_52 = arith.constant dense<0.000000e+00> : vector<1xf32>
    %130 = vector.multi_reduction <add>, %129, %cst_52 [1, 2] : vector<1x8x1xf32> to vector<1xf32>
    %131 = vector.shape_cast %130 : vector<1xf32> to vector<1x1x1xf32>
    %132 = vector.extract %131[0, 0, 0] : f32 from vector<1x1x1xf32>
    %133 = vector.broadcast %132 : f32 to vector<1x1xf32>
    %cst_53 = arith.constant 8.000000e+00 : f32
    %134 = vector.broadcast %cst_53 : f32 to vector<1x1xf32>
    %135 = arith.divf %133, %134 : vector<1x1xf32>
    %cst_54 = arith.constant -5.000000e-01 : f32
    %136 = vector.broadcast %cst_54 : f32 to vector<1x1xf32>
    %137 = arith.mulf %136, %135 : vector<1x1xf32>
    %cst_55 = arith.constant dense<0.000000e+00> : vector<8x128xf32>
    %138 = tpu.matmul %15, %7, %cst_55 {dimension_numbers = #tpu.dot_dimension_numbers<[1], [0], [0], [1], [0, 0, 1, 1], [], []>} : vector<8x32xf32>, vector<32x128xf32>, vector<8x128xf32> -> vector<8x128xf32>
    %cst_56 = arith.constant dense<0.000000e+00> : vector<8x128xf32>
    %139 = tpu.matmul %113, %8, %cst_56 {dimension_numbers = #tpu.dot_dimension_numbers<[1], [0], [0], [1], [0, 0, 1, 1], [], []>} : vector<8x32xf32>, vector<32x128xf32>, vector<8x128xf32> -> vector<8x128xf32>
    %140 = arith.addf %138, %139 : vector<8x128xf32>
    %141 = vector.broadcast %14 : vector<1x128xf32> to vector<8x128xf32>
    %142 = arith.addf %140, %141 : vector<8x128xf32>
    %143 = vector.extract_strided_slice %142 {offsets = [0, 0], sizes = [8, 64], strides = [1, 1]} : vector<8x128xf32> to vector<8x64xf32>
    %144 = vector.extract_strided_slice %142 {offsets = [0, 64], sizes = [8, 64], strides = [1, 1]} : vector<8x128xf32> to vector<8x64xf32>
    %cst_57 = arith.constant dense<0.000000e+00> : vector<8x8xf32>
    %145 = tpu.matmul %143, %144, %cst_57 {dimension_numbers = #tpu.dot_dimension_numbers<[1], [1], [0], [0], [0, 0, 1, 0], [], []>} : vector<8x64xf32>, vector<8x64xf32>, vector<8x8xf32> -> vector<8x8xf32>
    %cst_58 = arith.constant dense<0.000000e+00> : vector<8x32xf32>
    %146 = tpu.matmul %145, %18, %cst_58 {dimension_numbers = #tpu.dot_dimension_numbers<[1], [0], [0], [1], [0, 0, 1, 1], [], []>} : vector<8x8xf32>, vector<8x32xf32>, vector<8x32xf32> -> vector<8x32xf32>
    %147 = arith.mulf %17, %146 : vector<8x32xf32>
    %cst_59 = arith.constant dense<0.000000e+00> : vector<32xf32>
    %148 = vector.multi_reduction <add>, %147, %cst_59 [0] : vector<8x32xf32> to vector<32xf32>
    %149 = vector.shape_cast %148 : vector<32xf32> to vector<1x32xf32>
    %cst_60 = arith.constant 0.000000e+00 : f32
    %150 = vector.broadcast %cst_60 : f32 to vector<1x32xf32>
    %151 = arith.subf %150, %149 : vector<1x32xf32>
    %152 = math.exp %151 : vector<1x32xf32>
    %cst_61 = arith.constant 1.000000e+00 : f32
    %153 = vector.broadcast %cst_61 : f32 to vector<1x32xf32>
    %154 = arith.addf %153, %152 : vector<1x32xf32>
    %155 = tpu.reciprocal %154 {approx = true} : vector<1x32xf32> -> vector<1x32xf32>
    %cst_62 = arith.constant 1.000000e+00 : f32
    %156 = vector.broadcast %cst_62 : f32 to vector<1x32xf32>
    %157 = arith.minimumf %155, %156 : vector<1x32xf32>
    %158 = vector.extract_strided_slice %157 {offsets = [0, 0], sizes = [1, 16], strides = [1, 1]} : vector<1x32xf32> to vector<1x16xf32>
    %cst_63 = arith.constant 1.000000e-15 : f32
    %159 = vector.broadcast %cst_63 : f32 to vector<1x16xf32>
    %160 = arith.addf %158, %159 : vector<1x16xf32>
    %161 = math.log %160 : vector<1x16xf32>
    %162 = vector.shape_cast %161 : vector<1x16xf32> to vector<1x1x16xf32>
    %cst_64 = arith.constant dense<0.000000e+00> : vector<1xf32>
    %163 = vector.multi_reduction <add>, %162, %cst_64 [1, 2] : vector<1x1x16xf32> to vector<1xf32>
    %164 = vector.shape_cast %163 : vector<1xf32> to vector<1x1x1xf32>
    %165 = vector.extract %164[0, 0, 0] : f32 from vector<1x1x1xf32>
    %166 = vector.broadcast %165 : f32 to vector<1x1xf32>
    %cst_65 = arith.constant 1.600000e+01 : f32
    %167 = vector.broadcast %cst_65 : f32 to vector<1x1xf32>
    %168 = arith.divf %166, %167 : vector<1x1xf32>
    %cst_66 = arith.constant 0.000000e+00 : f32
    %169 = vector.broadcast %cst_66 : f32 to vector<1x1xf32>
    %170 = arith.subf %169, %168 : vector<1x1xf32>
    %171 = vector.extract_strided_slice %157 {offsets = [0, 16], sizes = [1, 16], strides = [1, 1]} : vector<1x32xf32> to vector<1x16xf32>
    %cst_67 = arith.constant 1.000000e+00 : f32
    %172 = vector.broadcast %cst_67 : f32 to vector<1x16xf32>
    %173 = arith.subf %172, %171 : vector<1x16xf32>
    %cst_68 = arith.constant 1.000000e-15 : f32
    %174 = vector.broadcast %cst_68 : f32 to vector<1x16xf32>
    %175 = arith.addf %173, %174 : vector<1x16xf32>
    %176 = math.log %175 : vector<1x16xf32>
    %177 = vector.shape_cast %176 : vector<1x16xf32> to vector<1x1x16xf32>
    %cst_69 = arith.constant dense<0.000000e+00> : vector<1xf32>
    %178 = vector.multi_reduction <add>, %177, %cst_69 [1, 2] : vector<1x1x16xf32> to vector<1xf32>
    %179 = vector.shape_cast %178 : vector<1xf32> to vector<1x1x1xf32>
    %180 = vector.extract %179[0, 0, 0] : f32 from vector<1x1x1xf32>
    %181 = vector.broadcast %180 : f32 to vector<1x1xf32>
    %cst_70 = arith.constant 1.600000e+01 : f32
    %182 = vector.broadcast %cst_70 : f32 to vector<1x1xf32>
    %183 = arith.divf %181, %182 : vector<1x1xf32>
    %184 = arith.subf %170, %183 : vector<1x1xf32>
    %cst_71 = arith.constant 8.000000e+00 : f32
    %185 = vector.broadcast %cst_71 : f32 to vector<1x1xf32>
    %186 = arith.divf %137, %185 : vector<1x1xf32>
    %187 = arith.addf %184, %186 : vector<1x1xf32>
    %cst_72 = arith.constant 0.000000e+00 : f32
    %188 = vector.broadcast %cst_72 : f32 to vector<1x94xf32>
    %189 = tpu.concatenate %157, %187, %102, %188 in 1 : vector<1x32xf32>, vector<1x1xf32>, vector<1x1xf32>, vector<1x94xf32> -> vector<1x128xf32>
    %c0_73 = arith.constant 0 : index
    %c0_74 = arith.constant 0 : index
    %190 = vector.load %arg4[%c0_73, %c0_74] : memref<1x128xf32, #tpu.memory_space<vmem>>, vector<1x128xf32>
    tpu.vector_store %arg4[%c0_73, %c0_74], %189 {strides = array<i32>} : memref<1x128xf32, #tpu.memory_space<vmem>>, vector<1x128xf32>,
    return
  }
}

</mosaic_0001>

<llo_original>
// kernel: dvgga_forward.1
$region0: #{dvgga_forward.1}
  #allocation0 [shape = 'u32[]', space=smem, size = 0x4, offset = 0x4, fixed_abs, tag = 'smem constant byte address 0x4 - core index']
  #allocation1 [shape = 'u32[72,128]{1,0:T(1,128)}', space=vmem, size = 0x9000, scoped, tag = 'internal scratch']
  %s0 = inlined_call_operand.vmem [shape: f32[128,64], index: 0, kind: input, shape index: {}]
  %s1 = inlined_call_operand.vmem [shape: f32[64,16], index: 1, kind: input, shape index: {}]
  %s2 = inlined_call_operand.vmem [shape: f32[224,128], index: 2, kind: input, shape index: {}]
  %s3 = inlined_call_operand.vmem [shape: f32[16,128], index: 3, kind: input, shape index: {}]
  %s4 = inlined_call_operand.vmem [shape: f32[1,128], index: 4, kind: output, shape index: {}]
  %s5 = sld [smem:[#allocation0]]
  $region26: #{dvgga_forward.1} parent=0
    _
  %s7 = ssub.s32 1, %s5
  %s8 = scalar_select 0, %s7, %s5
  // Predicated region
  $region2: #{dvgga_forward.1} parent=0 // pred_check
    _
  $region3: #{dvgga_forward.1} parent=0 // pred_check_branch
    %10 = sbr.rel (0) target = $region5
  $region4: #{dvgga_forward.1} parent=0 // pred_region
    _
  $region5: #{dvgga_forward.1} parent=0 // pred_fallthru
    _
  // Predicated region
  $region6: #{dvgga_forward.1} parent=0 // pred_check
    _
  $region7: #{dvgga_forward.1} parent=0 // pred_check_branch
    %12 = sbr.rel (0) target = $region9
  $region8: #{dvgga_forward.1} parent=0 // pred_region
    _
  $region9: #{dvgga_forward.1} parent=0 // pred_fallthru
    _
  // Predicated region
  $region10: #{dvgga_forward.1} parent=0 // pred_check
    _
  $region11: #{dvgga_forward.1} parent=0 // pred_check_branch
    %14 = sbr.rel (0) target = $region13
  $region12: #{dvgga_forward.1} parent=0 // pred_region
    _
  $region13: #{dvgga_forward.1} parent=0 // pred_fallthru
    _
  // Predicated region
  $region14: #{dvgga_forward.1} parent=0 // pred_check
    _
  $region15: #{dvgga_forward.1} parent=0 // pred_check_branch
    %16 = sbr.rel (0) target = $region17
  $region16: #{dvgga_forward.1} parent=0 // pred_region
    _
  $region17: #{dvgga_forward.1} parent=0 // pred_fallthru
    _
  %v17 = vld [vmem:[%s0] sm:$0xff]
  %v18 = vld [vmem:[%s0 + $0x8] sm:$0xff]
  %v19 = vld [vmem:[%s0 + $0x10] sm:$0xff]
  %v20 = vld [vmem:[%s0 + $0x18] sm:$0xff]
  %v21 = vld [vmem:[%s0 + $0x20] sm:$0xff]
  %v22 = vld [vmem:[%s0 + $0x28] sm:$0xff]
  %v23 = vld [vmem:[%s0 + $0x30] sm:$0xff]
  %v24 = vld [vmem:[%s0 + $0x38] sm:$0xff]
  %v25 = vld [vmem:[%s0 + $0x40] sm:$0xff]
  %v26 = vld [vmem:[%s0 + $0x48] sm:$0xff]
  %v27 = vld [vmem:[%s0 + $0x50] sm:$0xff]
  %v28 = vld [vmem:[%s0 + $0x58] sm:$0xff]
  %v29 = vld [vmem:[%s0 + $0x60] sm:$0xff]
  %v30 = vld [vmem:[%s0 + $0x68] sm:$0xff]
  %v31 = vld [vmem:[%s0 + $0x70] sm:$0xff]
  %v32 = vld [vmem:[%s0 + $0x78] sm:$0xff]
  %v33 = vld [vmem:[%s2] sm:$0xff]
  %v34 = vld [vmem:[%s2 + $0x8] sm:$0xff]
  %v35 = vld [vmem:[%s2 + $0x10] sm:$0xff]
  %v36 = vld [vmem:[%s2 + $0x18] sm:$0xff]
  %v37 = vld [vmem:[%s2 + $0x20] sm:$0xff]
  %v38 = vld [vmem:[%s2 + $0x28] sm:$0xff]
  %v39 = vld [vmem:[%s2 + $0x30] sm:$0xff]
  %v40 = vld [vmem:[%s2 + $0x38] sm:$0xff]
  %v41 = vld [vmem:[%s2 + $0x40] sm:$0xff]
  %v42 = vld [vmem:[%s2 + $0x48] sm:$0xff]
  %v43 = vld [vmem:[%s2 + $0x50] sm:$0xff]
  %v44 = vld [vmem:[%s2 + $0x58] sm:$0xff]
  %v45 = vld [vmem:[%s2 + $0x60] sm:$0xff]
  %v46 = vld [vmem:[%s2 + $0x68] sm:$0xff]
  %v47 = vld [vmem:[%s2 + $0x70] sm:$0xff]
  %v48 = vld [vmem:[%s2 + $0x78] sm:$0xff]
  %v49 = vld [vmem:[%s2 + $0x80] sm:$0xff]
  %v50 = vld [vmem:[%s2 + $0x88] sm:$0xff]
  %v51 = vld [vmem:[%s2 + $0x90] sm:$0xff]
  %v52 = vld [vmem:[%s2 + $0x98] sm:$0xff]
  %v53 = vld [vmem:[%s2 + $0xa0] sm:$0xff]
  %v54 = vld [vmem:[%s2 + $0xa8] sm:$0xff]
  %v55 = vld [vmem:[%s2 + $0xb0] sm:$0xff]
  %v56 = vld [vmem:[%s2 + $0xb8] sm:$0xff]
  %v57 = vld [vmem:[%s2 + $0xc0] sm:$0xff]
  %v58 = vld [vmem:[%s2 + $0xc8] sm:$0xff]
  %v59 = vld [vmem:[%s2 + $0xd0] sm:$0xff]
  %v60 = vld [vmem:[%s2 + $0xd8] sm:$0xff]
  %v61 = vld [vmem:[%s3] sm:$0x1]
  %v62 = vld [vmem:[%s3 + $0x1] sm:$0x1]
  %v63 = vld [vmem:[%s3 + $0x2] sm:$0x1]
  %v64 = vld [vmem:[%s3 + $0x3] sm:$0x1]
  %v65 = vld [vmem:[%s3 + $0x4] sm:$0x1]
  %v66 = vld [vmem:[%s3 + $0x5] sm:$0x1]
  %v67 = vld [vmem:[%s3 + $0x8] sm:$0xff]
  %v68 = vld [vmem:[%s1] sm:$0xff]
  %v69 = vld [vmem:[%s1 + $0x8] sm:$0xff]
  %v70 = vld [vmem:[%s1 + $0x10] sm:$0xff]
  %v71 = vld [vmem:[%s1 + $0x18] sm:$0xff]
  %v72 = vld [vmem:[%s1 + $0x20] sm:$0xff]
  %v73 = vld [vmem:[%s1 + $0x28] sm:$0xff]
  %v74 = vld [vmem:[%s1 + $0x30] sm:$0xff]
  %v75 = vld [vmem:[%s1 + $0x38] sm:$0xff]
  %vm76 = vcmask 130048
  %v78 = vsel %vm76, %v68, 0
  %v81 = vsel %vm76, %v69, 0
  %v84 = vsel %vm76, %v70, 0
  %v87 = vsel %vm76, %v71, 0
  %v90 = vsel %vm76, %v72, 0
  %v93 = vsel %vm76, %v73, 0
  %v96 = vsel %vm76, %v74, 0
  %v99 = vsel %vm76, %v75, 0
  %101 = vmatpush.msra.mxu0 0.0
  %102 = vmatpush.msra.mxu0 0.0
  %103 = vmatpush.msra.mxu0 0.0
  %104 = vmatpush.msra.mxu0 0.0
  %105 = vmatpush.msra.mxu0 0.0
  %106 = vmatpush.msra.mxu0 0.0
  %107 = vmatpush.msra.mxu0 0.0
  %108 = vmatpush.msra.mxu0 0.0
  %109 = vmatpush.msra.mxu0 0.0
  %110 = vmatpush.msra.mxu0 0.0
  %111 = vmatpush.msra.mxu0 0.0
  %112 = vmatpush.msra.mxu0 0.0
  %113 = vmatpush.msra.mxu0 0.0
  %114 = vmatpush.msra.mxu0 0.0
  %115 = vmatpush.msra.mxu0 %v34
  %116 = vmatpush.msra.mxu0 %v33
  %117 = vmatmul.f32.gmra.mxu0 %v78
  %v118 = vpop.f32.mrf.mxu0
  %v119 = vadd.f32 0.0, %v118
  %120 = vmatmul.f32.gmra.mxu0 %v81
  %v121 = vpop.f32.mrf.mxu0
  %v122 = vadd.f32 0.0, %v121
  %123 = vmatmul.f32.gmra.mxu0 %v84
  %v124 = vpop.f32.mrf.mxu0
  %v125 = vadd.f32 0.0, %v124
  %126 = vmatmul.f32.gmra.mxu0 %v87
  %v127 = vpop.f32.mrf.mxu0
  %v128 = vadd.f32 0.0, %v127
  %129 = vmatmul.f32.gmra.mxu0 %v90
  %v130 = vpop.f32.mrf.mxu0
  %v131 = vadd.f32 0.0, %v130
  %132 = vmatmul.f32.gmra.mxu0 %v93
  %v133 = vpop.f32.mrf.mxu0
  %v134 = vadd.f32 0.0, %v133
  %135 = vmatmul.f32.gmra.mxu0 %v96
  %v136 = vpop.f32.mrf.mxu0
  %v137 = vadd.f32 0.0, %v136
  %138 = vmatmul.f32.gmra.mxu0 %v99
  %v139 = vpop.f32.mrf.mxu0
  %v140 = vadd.f32 0.0, %v139
  %141 = vdwg.mxu0
  %v142 = vperm.slane %v61, 0
  %vm143 = vcmask 523264
  %v145 = vsel %vm143, %v17, 0
  %v148 = vsel %vm143, %v18, 0
  %v151 = vsel %vm143, %v19, 0
  %v154 = vsel %vm143, %v20, 0
  %v157 = vsel %vm143, %v21, 0
  %v160 = vsel %vm143, %v22, 0
  %v163 = vsel %vm143, %v23, 0
  %v166 = vsel %vm143, %v24, 0
  %168 = vmatpush.msra.mxu0 0.0
  %169 = vmatpush.msra.mxu0 0.0
  %170 = vmatpush.msra.mxu0 0.0
  %171 = vmatpush.msra.mxu0 0.0
  %172 = vmatpush.msra.mxu0 0.0
  %173 = vmatpush.msra.mxu0 0.0
  %174 = vmatpush.msra.mxu0 0.0
  %175 = vmatpush.msra.mxu0 0.0
  %176 = vmatpush.msra.mxu0 %v140
  %177 = vmatpush.msra.mxu0 %v137
  %178 = vmatpush.msra.mxu0 %v134
  %179 = vmatpush.msra.mxu0 %v131
  %180 = vmatpush.msra.mxu0 %v128
  %181 = vmatpush.msra.mxu0 %v125
  %182 = vmatpush.msra.mxu0 %v122
  %183 = vmatpush.msra.mxu0 %v119
  %184 = vmatmul.f32.gmra.mxu0 %v145
  %v185 = vpop.f32.mrf.mxu0
  %v186 = vadd.f32 %v142, %v185
  %187 = vmatmul.f32.gmra.mxu0 %v148
  %v188 = vpop.f32.mrf.mxu0
  %v189 = vadd.f32 %v142, %v188
  %190 = vmatmul.f32.gmra.mxu0 %v151
  %v191 = vpop.f32.mrf.mxu0
  %v192 = vadd.f32 %v142, %v191
  %193 = vmatmul.f32.gmra.mxu0 %v154
  %v194 = vpop.f32.mrf.mxu0
  %v195 = vadd.f32 %v142, %v194
  %196 = vmatmul.f32.gmra.mxu0 %v157
  %v197 = vpop.f32.mrf.mxu0
  %v198 = vadd.f32 %v142, %v197
  %199 = vmatmul.f32.gmra.mxu0 %v160
  %v200 = vpop.f32.mrf.mxu0
  %v201 = vadd.f32 %v142, %v200
  %202 = vmatmul.f32.gmra.mxu0 %v163
  %v203 = vpop.f32.mrf.mxu0
  %v204 = vadd.f32 %v142, %v203
  %205 = vmatmul.f32.gmra.mxu0 %v166
  %v206 = vpop.f32.mrf.mxu0
  %v207 = vadd.f32 %v142, %v206
  %208 = vdwg.mxu0
  %v209 = vperm.slane %v62, 0
  %vm210 = vcmask 261120
  %v212 = vsel %vm210, %v186, 0
  %v215 = vsel %vm210, %v189, 0
  %v218 = vsel %vm210, %v192, 0
  %v221 = vsel %vm210, %v195, 0
  %v224 = vsel %vm210, %v198, 0
  %v227 = vsel %vm210, %v201, 0
  %v230 = vsel %vm210, %v204, 0
  %v233 = vsel %vm210, %v207, 0
  %235 = vmatpush.msra.mxu0 0.0
  %236 = vmatpush.msra.mxu0 0.0
  %237 = vmatpush.msra.mxu0 0.0
  %238 = vmatpush.msra.mxu0 0.0
  %239 = vmatpush.msra.mxu0 0.0
  %240 = vmatpush.msra.mxu0 0.0
  %241 = vmatpush.msra.mxu0 0.0
  %242 = vmatpush.msra.mxu0 0.0
  %243 = vmatpush.msra.mxu0 0.0
  %244 = vmatpush.msra.mxu0 0.0
  %245 = vmatpush.msra.mxu0 0.0
  %246 = vmatpush.msra.mxu0 0.0
  %247 = vmatpush.msra.mxu0 %v38
  %248 = vmatpush.msra.mxu0 %v37
  %249 = vmatpush.msra.mxu0 %v36
  %250 = vmatpush.msra.mxu0 %v35
  %251 = vmatmul.f32.gmra.mxu0 %v212
  %v252 = vpop.f32.mrf.mxu0
  %v253 = vadd.f32 %v209, %v252
  %254 = vmatmul.f32.gmra.mxu0 %v215
  %v255 = vpop.f32.mrf.mxu0
  %v256 = vadd.f32 %v209, %v255
  %257 = vmatmul.f32.gmra.mxu0 %v218
  %v258 = vpop.f32.mrf.mxu0
  %v259 = vadd.f32 %v209, %v258
  %260 = vmatmul.f32.gmra.mxu0 %v221
  %v261 = vpop.f32.mrf.mxu0
  %v262 = vadd.f32 %v209, %v261
  %263 = vmatmul.f32.gmra.mxu0 %v224
  %v264 = vpop.f32.mrf.mxu0
  %v265 = vadd.f32 %v209, %v264
  %266 = vmatmul.f32.gmra.mxu0 %v227
  %v267 = vpop.f32.mrf.mxu0
  %v268 = vadd.f32 %v209, %v267
  %269 = vmatmul.f32.gmra.mxu0 %v230
  %v270 = vpop.f32.mrf.mxu0
  %v271 = vadd.f32 %v209, %v270
  %272 = vmatmul.f32.gmra.mxu0 %v233
  %v273 = vpop.f32.mrf.mxu0
  %v274 = vadd.f32 %v209, %v273
  %275 = vdwg.mxu0
  %v276 = vtanh.pop %v253
  %v277 = vtanh.pop %v256
  %v278 = vtanh.pop %v259
  %v279 = vtanh.pop %v262
  %v280 = vtanh.pop %v265
  %v281 = vtanh.pop %v268
  %v282 = vtanh.pop %v271
  %v283 = vtanh.pop %v274
  %v284 = vperm.slane %v63, 0
  %v286 = vsel %vm76, %v276, 0
  %v289 = vsel %vm76, %v277, 0
  %v292 = vsel %vm76, %v278, 0
  %v295 = vsel %vm76, %v279, 0
  %v298 = vsel %vm76, %v280, 0
  %v301 = vsel %vm76, %v281, 0
  %v304 = vsel %vm76, %v282, 0
  %v307 = vsel %vm76, %v283, 0
  %309 = vmatpush.msra.mxu0 0.0
  %310 = vmatpush.msra.mxu0 0.0
  %311 = vmatpush.msra.mxu0 0.0
  %312 = vmatpush.msra.mxu0 0.0
  %313 = vmatpush.msra.mxu0 0.0
  %314 = vmatpush.msra.mxu0 0.0
  %315 = vmatpush.msra.mxu0 0.0
  %316 = vmatpush.msra.mxu0 0.0
  %317 = vmatpush.msra.mxu0 0.0
  %318 = vmatpush.msra.mxu0 0.0
  %319 = vmatpush.msra.mxu0 0.0
  %320 = vmatpush.msra.mxu0 0.0
  %321 = vmatpush.msra.mxu0 0.0
  %322 = vmatpush.msra.mxu0 0.0
  %323 = vmatpush.msra.mxu0 %v40
  %324 = vmatpush.msra.mxu0 %v39
  %325 = vmatmul.f32.gmra.mxu0 %v286
  %v326 = vpop.f32.mrf.mxu0
  %v327 = vadd.f32 %v284, %v326
  %328 = vmatmul.f32.gmra.mxu0 %v289
  %v329 = vpop.f32.mrf.mxu0
  %v330 = vadd.f32 %v284, %v329
  %331 = vmatmul.f32.gmra.mxu0 %v292
  %v332 = vpop.f32.mrf.mxu0
  %v333 = vadd.f32 %v284, %v332
  %334 = vmatmul.f32.gmra.mxu0 %v295
  %v335 = vpop.f32.mrf.mxu0
  %v336 = vadd.f32 %v284, %v335
  %337 = vmatmul.f32.gmra.mxu0 %v298
  %v338 = vpop.f32.mrf.mxu0
  %v339 = vadd.f32 %v284, %v338
  %340 = vmatmul.f32.gmra.mxu0 %v301
  %v341 = vpop.f32.mrf.mxu0
  %v342 = vadd.f32 %v284, %v341
  %343 = vmatmul.f32.gmra.mxu0 %v304
  %v344 = vpop.f32.mrf.mxu0
  %v345 = vadd.f32 %v284, %v344
  %346 = vmatmul.f32.gmra.mxu0 %v307
  %v347 = vpop.f32.mrf.mxu0
  %v348 = vadd.f32 %v284, %v347
  %349 = vdwg.mxu0
  %358 = vrot.lane.b32.xlu0 %v327, 127
  %v359 = vpop.permute.xlu0 %358
  %360 = vrot.lane.b32.xlu0 %v330, 127
  %v361 = vpop.permute.xlu0 %360
  %362 = vrot.lane.b32.xlu0 %v333, 127
  %v363 = vpop.permute.xlu0 %362
  %364 = vrot.lane.b32.xlu0 %v336, 127
  %v365 = vpop.permute.xlu0 %364
  %366 = vrot.lane.b32.xlu0 %v339, 127
  %v367 = vpop.permute.xlu0 %366
  %368 = vrot.lane.b32.xlu0 %v342, 127
  %v369 = vpop.permute.xlu0 %368
  %370 = vrot.lane.b32.xlu0 %v345, 127
  %v371 = vpop.permute.xlu0 %370
  %372 = vrot.lane.b32.xlu0 %v348, 127
  %v373 = vpop.permute.xlu0 %372
  %v382 = vsub.f32 %v327, %v359
  %v383 = vsub.f32 %v330, %v361
  %v384 = vsub.f32 %v333, %v363
  %v385 = vsub.f32 %v336, %v365
  %v386 = vsub.f32 %v339, %v367
  %v387 = vsub.f32 %v342, %v369
  %v388 = vsub.f32 %v345, %v371
  %v389 = vsub.f32 %v348, %v373
  %v390 = vsub.f32 0.0, %v382
  %v391 = vsub.f32 0.0, %v383
  %v392 = vsub.f32 0.0, %v384
  %v393 = vsub.f32 0.0, %v385
  %v394 = vsub.f32 0.0, %v386
  %v395 = vsub.f32 0.0, %v387
  %v396 = vsub.f32 0.0, %v388
  %v397 = vsub.f32 0.0, %v389
  %v398 = vmul.f32 %v390, 1.442695
  %v399 = vpow.pop %v398
  %v400 = vmul.f32 %v391, 1.442695
  %v401 = vpow.pop %v400
  %v402 = vmul.f32 %v392, 1.442695
  %v403 = vpow.pop %v402
  %v404 = vmul.f32 %v393, 1.442695
  %v405 = vpow.pop %v404
  %v406 = vmul.f32 %v394, 1.442695
  %v407 = vpow.pop %v406
  %v408 = vmul.f32 %v395, 1.442695
  %v409 = vpow.pop %v408
  %v410 = vmul.f32 %v396, 1.442695
  %v411 = vpow.pop %v410
  %v412 = vmul.f32 %v397, 1.442695
  %v413 = vpow.pop %v412
  %v414 = vadd.f32 %v399, 1.0
  %v415 = vadd.f32 %v401, 1.0
  %v416 = vadd.f32 %v403, 1.0
  %v417 = vadd.f32 %v405, 1.0
  %v418 = vadd.f32 %v407, 1.0
  %v419 = vadd.f32 %v409, 1.0
  %v420 = vadd.f32 %v411, 1.0
  %v421 = vadd.f32 %v413, 1.0
  %v422 = vrcp.pop %v414
  %v423 = vmul.f32 %v414, %v422
  %v424 = vsub.f32 1.0, %v423
  %v425 = vmul.f32 %v422, %v424
  %v426 = vadd.f32 %v422, %v425
  %vm427 = vweird.f32 %v414
  %vm428 = vweird.f32 %v422
  %vm429 = vmor %vm427, %vm428
  %v430 = vsel %vm429, %v422, %v426
  %v431 = vand.u32 2147483647, %v414
  %vm432 = vcmp.eq.f32.partialorder %v431, 8.507059e+37
  %v433 = vand.u32 %v414, 2147483648
  %v434 = vor.u32 1.1754944e-38, %v433
  %v435 = vsel %vm432, %v434, %v430
  %v436 = vmul.f32 1.0, %v435
  %v437 = vrcp.pop %v415
  %v438 = vmul.f32 %v415, %v437
  %v439 = vsub.f32 1.0, %v438
  %v440 = vmul.f32 %v437, %v439
  %v441 = vadd.f32 %v437, %v440
  %vm442 = vweird.f32 %v415
  %vm443 = vweird.f32 %v437
  %vm444 = vmor %vm442, %vm443
  %v445 = vsel %vm444, %v437, %v441
  %v446 = vand.u32 2147483647, %v415
  %vm447 = vcmp.eq.f32.partialorder %v446, 8.507059e+37
  %v448 = vand.u32 %v415, 2147483648
  %v449 = vor.u32 1.1754944e-38, %v448
  %v450 = vsel %vm447, %v449, %v445
  %v451 = vmul.f32 1.0, %v450
  %v452 = vrcp.pop %v416
  %v453 = vmul.f32 %v416, %v452
  %v454 = vsub.f32 1.0, %v453
  %v455 = vmul.f32 %v452, %v454
  %v456 = vadd.f32 %v452, %v455
  %vm457 = vweird.f32 %v416
  %vm458 = vweird.f32 %v452
  %vm459 = vmor %vm457, %vm458
  %v460 = vsel %vm459, %v452, %v456
  %v461 = vand.u32 2147483647, %v416
  %vm462 = vcmp.eq.f32.partialorder %v461, 8.507059e+37
  %v463 = vand.u32 %v416, 2147483648
  %v464 = vor.u32 1.1754944e-38, %v463
  %v465 = vsel %vm462, %v464, %v460
  %v466 = vmul.f32 1.0, %v465
  %v467 = vrcp.pop %v417
  %v468 = vmul.f32 %v417, %v467
  %v469 = vsub.f32 1.0, %v468
  %v470 = vmul.f32 %v467, %v469
  %v471 = vadd.f32 %v467, %v470
  %vm472 = vweird.f32 %v417
  %vm473 = vweird.f32 %v467
  %vm474 = vmor %vm472, %vm473
  %v475 = vsel %vm474, %v467, %v471
  %v476 = vand.u32 2147483647, %v417
  %vm477 = vcmp.eq.f32.partialorder %v476, 8.507059e+37
  %v478 = vand.u32 %v417, 2147483648
  %v479 = vor.u32 1.1754944e-38, %v478
  %v480 = vsel %vm477, %v479, %v475
  %v481 = vmul.f32 1.0, %v480
  %v482 = vrcp.pop %v418
  %v483 = vmul.f32 %v418, %v482
  %v484 = vsub.f32 1.0, %v483
  %v485 = vmul.f32 %v482, %v484
  %v486 = vadd.f32 %v482, %v485
  %vm487 = vweird.f32 %v418
  %vm488 = vweird.f32 %v482
  %vm489 = vmor %vm487, %vm488
  %v490 = vsel %vm489, %v482, %v486
  %v491 = vand.u32 2147483647, %v418
  %vm492 = vcmp.eq.f32.partialorder %v491, 8.507059e+37
  %v493 = vand.u32 %v418, 2147483648
  %v494 = vor.u32 1.1754944e-38, %v493
  %v495 = vsel %vm492, %v494, %v490
  %v496 = vmul.f32 1.0, %v495
  %v497 = vrcp.pop %v419
  %v498 = vmul.f32 %v419, %v497
  %v499 = vsub.f32 1.0, %v498
  %v500 = vmul.f32 %v497, %v499
  %v501 = vadd.f32 %v497, %v500
  %vm502 = vweird.f32 %v419
  %vm503 = vweird.f32 %v497
  %vm504 = vmor %vm502, %vm503
  %v505 = vsel %vm504, %v497, %v501
  %v506 = vand.u32 2147483647, %v419
  %vm507 = vcmp.eq.f32.partialorder %v506, 8.507059e+37
  %v508 = vand.u32 %v419, 2147483648
  %v509 = vor.u32 1.1754944e-38, %v508
  %v510 = vsel %vm507, %v509, %v505
  %v511 = vmul.f32 1.0, %v510
  %v512 = vrcp.pop %v420
  %v513 = vmul.f32 %v420, %v512
  %v514 = vsub.f32 1.0, %v513
  %v515 = vmul.f32 %v512, %v514
  %v516 = vadd.f32 %v512, %v515
  %vm517 = vweird.f32 %v420
  %vm518 = vweird.f32 %v512
  %vm519 = vmor %vm517, %vm518
  %v520 = vsel %vm519, %v512, %v516
  %v521 = vand.u32 2147483647, %v420
  %vm522 = vcmp.eq.f32.partialorder %v521, 8.507059e+37
  %v523 = vand.u32 %v420, 2147483648
  %v524 = vor.u32 1.1754944e-38, %v523
  %v525 = vsel %vm522, %v524, %v520
  %v526 = vmul.f32 1.0, %v525
  %v527 = vrcp.pop %v421
  %v528 = vmul.f32 %v421, %v527
  %v529 = vsub.f32 1.0, %v528
  %v530 = vmul.f32 %v527, %v529
  %v531 = vadd.f32 %v527, %v530
  %vm532 = vweird.f32 %v421
  %vm533 = vweird.f32 %v527
  %vm534 = vmor %vm532, %vm533
  %v535 = vsel %vm534, %v527, %v531
  %v536 = vand.u32 2147483647, %v421
  %vm537 = vcmp.eq.f32.partialorder %v536, 8.507059e+37
  %v538 = vand.u32 %v421, 2147483648
  %v539 = vor.u32 1.1754944e-38, %v538
  %v540 = vsel %vm537, %v539, %v535
  %v541 = vmul.f32 1.0, %v540
  %v542 = vsub.f32 1.0, %v436
  %v543 = vsub.f32 1.0, %v451
  %v544 = vsub.f32 1.0, %v466
  %v545 = vsub.f32 1.0, %v481
  %v546 = vsub.f32 1.0, %v496
  %v547 = vsub.f32 1.0, %v511
  %v548 = vsub.f32 1.0, %v526
  %v549 = vsub.f32 1.0, %v541
  %558 = vrot.lane.b32.xlu0 %v542, 1
  %v559 = vpop.permute.xlu0 %558
  %560 = vrot.lane.b32.xlu0 %v543, 1
  %v561 = vpop.permute.xlu0 %560
  %562 = vrot.lane.b32.xlu0 %v544, 1
  %v563 = vpop.permute.xlu0 %562
  %564 = vrot.lane.b32.xlu0 %v545, 1
  %v565 = vpop.permute.xlu0 %564
  %566 = vrot.lane.b32.xlu0 %v546, 1
  %v567 = vpop.permute.xlu0 %566
  %568 = vrot.lane.b32.xlu0 %v547, 1
  %v569 = vpop.permute.xlu0 %568
  %570 = vrot.lane.b32.xlu0 %v548, 1
  %v571 = vpop.permute.xlu0 %570
  %572 = vrot.lane.b32.xlu0 %v549, 1
  %v573 = vpop.permute.xlu0 %572
  %vm582 = vcmask 7168
  %v583 = vsel %vm582, %v436, %v559
  %v584 = vsel %vm582, %v451, %v561
  %v585 = vsel %vm582, %v466, %v563
  %v586 = vsel %vm582, %v481, %v565
  %v587 = vsel %vm582, %v496, %v567
  %v588 = vsel %vm582, %v511, %v569
  %v589 = vsel %vm582, %v526, %v571
  %v590 = vsel %vm582, %v541, %v573
  %v592 = vsel %vm143, %v25, 0
  %v595 = vsel %vm143, %v26, 0
  %v598 = vsel %vm143, %v27, 0
  %v601 = vsel %vm143, %v28, 0
  %v604 = vsel %vm143, %v29, 0
  %v607 = vsel %vm143, %v30, 0
  %v610 = vsel %vm143, %v31, 0
  %v613 = vsel %vm143, %v32, 0
  %615 = vmatpush.msra.mxu0 0.0
  %616 = vmatpush.msra.mxu0 0.0
  %617 = vmatpush.msra.mxu0 0.0
  %618 = vmatpush.msra.mxu0 0.0
  %619 = vmatpush.msra.mxu0 0.0
  %620 = vmatpush.msra.mxu0 0.0
  %621 = vmatpush.msra.mxu0 0.0
  %622 = vmatpush.msra.mxu0 0.0
  %623 = vmatpush.msra.mxu0 %v590
  %624 = vmatpush.msra.mxu0 %v589
  %625 = vmatpush.msra.mxu0 %v588
  %626 = vmatpush.msra.mxu0 %v587
  %627 = vmatpush.msra.mxu0 %v586
  %628 = vmatpush.msra.mxu0 %v585
  %629 = vmatpush.msra.mxu0 %v584
  %630 = vmatpush.msra.mxu0 %v583
  %631 = vmatmul.f32.gmra.mxu0 %v592
  %v632 = vpop.f32.mrf.mxu0
  %v633 = vadd.f32 0.0, %v632
  %634 = vmatmul.f32.gmra.mxu0 %v595
  %v635 = vpop.f32.mrf.mxu0
  %v636 = vadd.f32 0.0, %v635
  %637 = vmatmul.f32.gmra.mxu0 %v598
  %v638 = vpop.f32.mrf.mxu0
  %v639 = vadd.f32 0.0, %v638
  %640 = vmatmul.f32.gmra.mxu0 %v601
  %v641 = vpop.f32.mrf.mxu0
  %v642 = vadd.f32 0.0, %v641
  %643 = vmatmul.f32.gmra.mxu0 %v604
  %v644 = vpop.f32.mrf.mxu0
  %v645 = vadd.f32 0.0, %v644
  %646 = vmatmul.f32.gmra.mxu0 %v607
  %v647 = vpop.f32.mrf.mxu0
  %v648 = vadd.f32 0.0, %v647
  %649 = vmatmul.f32.gmra.mxu0 %v610
  %v650 = vpop.f32.mrf.mxu0
  %v651 = vadd.f32 0.0, %v650
  %652 = vmatmul.f32.gmra.mxu0 %v613
  %v653 = vpop.f32.mrf.mxu0
  %v654 = vadd.f32 0.0, %v653
  %655 = vdwg.mxu0
  %v656 = vlaneseq
  %v657 = vshrl.u32 %v656, 7
  %v658 = vlaneseq
  %v659 = vand.u32 %v658, 127
  %v660 = vmul.u32 %v657, 8
  %vm661 = vcmp.ge.s32.totalorder %v659, %v660
  %v662 = vadd.s32 %v657, 1
  %v663 = vmul.u32 %v662, 8
  %vm664 = vcmp.lt.s32.totalorder %v659, %v663
  %vm665 = vmand %vm661, %vm664
  %v666 = vsel %vm665, 1, 0
  %v667 = vcvt.s32.f32 %v666
  %v668 = vmul.f32 %v436, %v633
  %v669 = vmul.f32 %v451, %v636
  %v670 = vmul.f32 %v466, %v639
  %v671 = vmul.f32 %v481, %v642
  %v672 = vmul.f32 %v496, %v645
  %v673 = vmul.f32 %v511, %v648
  %v674 = vmul.f32 %v526, %v651
  %v675 = vmul.f32 %v541, %v654
  %684 = vrot.lane.b32.xlu0 %v633, 127
  %v685 = vpop.permute.xlu0 %684
  %686 = vrot.lane.b32.xlu0 %v636, 127
  %v687 = vpop.permute.xlu0 %686
  %688 = vrot.lane.b32.xlu0 %v639, 127
  %v689 = vpop.permute.xlu0 %688
  %690 = vrot.lane.b32.xlu0 %v642, 127
  %v691 = vpop.permute.xlu0 %690
  %692 = vrot.lane.b32.xlu0 %v645, 127
  %v693 = vpop.permute.xlu0 %692
  %694 = vrot.lane.b32.xlu0 %v648, 127
  %v695 = vpop.permute.xlu0 %694
  %696 = vrot.lane.b32.xlu0 %v651, 127
  %v697 = vpop.permute.xlu0 %696
  %698 = vrot.lane.b32.xlu0 %v654, 127
  %v699 = vpop.permute.xlu0 %698
  %v708 = vmul.f32 %v542, %v685
  %v709 = vmul.f32 %v543, %v687
  %v710 = vmul.f32 %v544, %v689
  %v711 = vmul.f32 %v545, %v691
  %v712 = vmul.f32 %v546, %v693
  %v713 = vmul.f32 %v547, %v695
  %v714 = vmul.f32 %v548, %v697
  %v715 = vmul.f32 %v549, %v699
  %v716 = vmul.f32 %v436, %v685
  %v717 = vmul.f32 %v451, %v687
  %v718 = vmul.f32 %v466, %v689
  %v719 = vmul.f32 %v481, %v691
  %v720 = vmul.f32 %v496, %v693
  %v721 = vmul.f32 %v511, %v695
  %v722 = vmul.f32 %v526, %v697
  %v723 = vmul.f32 %v541, %v699
  %v724 = vmul.f32 %v542, %v633
  %v725 = vmul.f32 %v543, %v636
  %v726 = vmul.f32 %v544, %v639
  %v727 = vmul.f32 %v545, %v642
  %v728 = vmul.f32 %v546, %v645
  %v729 = vmul.f32 %v547, %v648
  %v730 = vmul.f32 %v548, %v651
  %v731 = vmul.f32 %v549, %v654
  %740 = vrot.lane.b32.xlu0 %v668, 32
  %v741 = vpop.permute.xlu0 %740
  %742 = vrot.lane.b32.xlu0 %v669, 32
  %v743 = vpop.permute.xlu0 %742
  %744 = vrot.lane.b32.xlu0 %v670, 32
  %v745 = vpop.permute.xlu0 %744
  %746 = vrot.lane.b32.xlu0 %v671, 32
  %v747 = vpop.permute.xlu0 %746
  %748 = vrot.lane.b32.xlu0 %v672, 32
  %v749 = vpop.permute.xlu0 %748
  %750 = vrot.lane.b32.xlu0 %v673, 32
  %v751 = vpop.permute.xlu0 %750
  %752 = vrot.lane.b32.xlu0 %v674, 32
  %v753 = vpop.permute.xlu0 %752
  %754 = vrot.lane.b32.xlu0 %v675, 32
  %v755 = vpop.permute.xlu0 %754
  %772 = vrot.lane.b32.xlu0 %v708, 33
  %v773 = vpop.permute.xlu0 %772
  %774 = vrot.lane.b32.xlu0 %v709, 33
  %v775 = vpop.permute.xlu0 %774
  %776 = vrot.lane.b32.xlu0 %v710, 33
  %v777 = vpop.permute.xlu0 %776
  %778 = vrot.lane.b32.xlu0 %v711, 33
  %v779 = vpop.permute.xlu0 %778
  %780 = vrot.lane.b32.xlu0 %v712, 33
  %v781 = vpop.permute.xlu0 %780
  %782 = vrot.lane.b32.xlu0 %v713, 33
  %v783 = vpop.permute.xlu0 %782
  %784 = vrot.lane.b32.xlu0 %v714, 33
  %v785 = vpop.permute.xlu0 %784
  %786 = vrot.lane.b32.xlu0 %v715, 33
  %v787 = vpop.permute.xlu0 %786
  %804 = vrot.lane.b32.xlu0 %v716, 34
  %v805 = vpop.permute.xlu0 %804
  %806 = vrot.lane.b32.xlu0 %v717, 34
  %v807 = vpop.permute.xlu0 %806
  %808 = vrot.lane.b32.xlu0 %v718, 34
  %v809 = vpop.permute.xlu0 %808
  %810 = vrot.lane.b32.xlu0 %v719, 34
  %v811 = vpop.permute.xlu0 %810
  %812 = vrot.lane.b32.xlu0 %v720, 34
  %v813 = vpop.permute.xlu0 %812
  %814 = vrot.lane.b32.xlu0 %v721, 34
  %v815 = vpop.permute.xlu0 %814
  %816 = vrot.lane.b32.xlu0 %v722, 34
  %v817 = vpop.permute.xlu0 %816
  %818 = vrot.lane.b32.xlu0 %v723, 34
  %v819 = vpop.permute.xlu0 %818
  %836 = vrot.lane.b32.xlu0 %v724, 35
  %v837 = vpop.permute.xlu0 %836
  %838 = vrot.lane.b32.xlu0 %v725, 35
  %v839 = vpop.permute.xlu0 %838
  %840 = vrot.lane.b32.xlu0 %v726, 35
  %v841 = vpop.permute.xlu0 %840
  %842 = vrot.lane.b32.xlu0 %v727, 35
  %v843 = vpop.permute.xlu0 %842
  %844 = vrot.lane.b32.xlu0 %v728, 35
  %v845 = vpop.permute.xlu0 %844
  %846 = vrot.lane.b32.xlu0 %v729, 35
  %v847 = vpop.permute.xlu0 %846
  %848 = vrot.lane.b32.xlu0 %v730, 35
  %v849 = vpop.permute.xlu0 %848
  %850 = vrot.lane.b32.xlu0 %v731, 35
  %v851 = vpop.permute.xlu0 %850
  %v860 = vsel %vm210, %v186, %v741
  %v861 = vsel %vm210, %v189, %v743
  %v862 = vsel %vm210, %v192, %v745
  %v863 = vsel %vm210, %v195, %v747
  %v864 = vsel %vm210, %v198, %v749
  %v865 = vsel %vm210, %v201, %v751
  %v866 = vsel %vm210, %v204, %v753
  %v867 = vsel %vm210, %v207, %v755
  %vm868 = vcmask 269312
  %v869 = vsel %vm868, %v860, %v773
  %v870 = vsel %vm868, %v861, %v775
  %v871 = vsel %vm868, %v862, %v777
  %v872 = vsel %vm868, %v863, %v779
  %v873 = vsel %vm868, %v864, %v781
  %v874 = vsel %vm868, %v865, %v783
  %v875 = vsel %vm868, %v866, %v785
  %v876 = vsel %vm868, %v867, %v787
  %vm877 = vcmask 277504
  %v878 = vsel %vm877, %v869, %v805
  %v879 = vsel %vm877, %v870, %v807
  %v880 = vsel %vm877, %v871, %v809
  %v881 = vsel %vm877, %v872, %v811
  %v882 = vsel %vm877, %v873, %v813
  %v883 = vsel %vm877, %v874, %v815
  %v884 = vsel %vm877, %v875, %v817
  %v885 = vsel %vm877, %v876, %v819
  %vm886 = vcmask 285696
  %v887 = vsel %vm886, %v878, %v837
  %v888 = vsel %vm886, %v879, %v839
  %v889 = vsel %vm886, %v880, %v841
  %v890 = vsel %vm886, %v881, %v843
  %v891 = vsel %vm886, %v882, %v845
  %v892 = vsel %vm886, %v883, %v847
  %v893 = vsel %vm886, %v884, %v849
  %v894 = vsel %vm886, %v885, %v851
  %v896 = vsel %vm143, %v667, 0
  %898 = vmatpush.msra.mxu0 0.0
  %899 = vmatpush.msra.mxu0 0.0
  %900 = vmatpush.msra.mxu0 0.0
  %901 = vmatpush.msra.mxu0 0.0
  %902 = vmatpush.msra.mxu0 0.0
  %903 = vmatpush.msra.mxu0 0.0
  %904 = vmatpush.msra.mxu0 0.0
  %905 = vmatpush.msra.mxu0 0.0
  %906 = vmatpush.msra.mxu0 %v894
  %907 = vmatpush.msra.mxu0 %v893
  %908 = vmatpush.msra.mxu0 %v892
  %909 = vmatpush.msra.mxu0 %v891
  %910 = vmatpush.msra.mxu0 %v890
  %911 = vmatpush.msra.mxu0 %v889
  %912 = vmatpush.msra.mxu0 %v888
  %913 = vmatpush.msra.mxu0 %v887
  %914 = vmatmul.f32.gmra.mxu0 %v896
  %v915 = vpop.f32.mrf.mxu0
  %v916 = vadd.f32 0.0, %v915
  %917 = vdwg.mxu0
  %v918 = vmul.f32 %v916, 0.5
  %v919 = vand.u32 2147483647, %v916
  %921 = vrot.lane.b32.xlu0 %v919, 126
  %v922 = vpop.permute.xlu0 %921
  %v924 = vadd.f32 %v919, %v922
  %v925 = vmax.f32 %v924, 1e-12
  %v926 = vrcp.pop %v925
  %v927 = vmul.f32 %v916, %v926
  %v928 = vsub.f32 %v927, 1.0
  %v929 = vmul.f32 %v928, %v928
  %931 = vrot.lane.b32.xlu0 %v929, 127
  %v932 = vpop.permute.xlu0 %931
  %v934 = vadd.f32 %v929, %v932
  %v935 = vmul.f32 %v934, 0.5
  %937 = vrot.lane.b32.xlu0 %v935, 96
  %v938 = vpop.permute.xlu0 %937
  %v940 = vsel %vm582, %v938, 0.0
  %941 = vadd.xlane.f32.xlu0 %v940
  %v942 = vpop.xlane.xlu0 %941
  %v943 = vrot.slane %v942, 4
  %v944 = vadd.f32 %v942, %v943
  %v945 = vrot.slane %v944, 2
  %v946 = vadd.f32 %v944, %v945
  %v947 = vrot.slane %v946, 1
  %v948 = vadd.f32 %v946, %v947
  %s949 = vtos %v948
  %v950 = vstv %s949
  %v951 = vrcp.pop 8.0
  %v952 = vmul.f32 8.0, %v951
  %v953 = vsub.f32 1.0, %v952
  %v954 = vmul.f32 %v951, %v953
  %v955 = vadd.f32 %v951, %v954
  %vm956 = vweird.f32 %v951
  %v957 = vsel %vm956, %v951, %v955
  %v958 = vmul.f32 %v950, %v957
  %v960 = vsel %vm210, %v918, 0
  %962 = vmatpush.msra.mxu0 0.0
  %963 = vmatpush.msra.mxu0 0.0
  %964 = vmatpush.msra.mxu0 0.0
  %965 = vmatpush.msra.mxu0 0.0
  %966 = vmatpush.msra.mxu0 0.0
  %967 = vmatpush.msra.mxu0 0.0
  %968 = vmatpush.msra.mxu0 0.0
  %969 = vmatpush.msra.mxu0 0.0
  %970 = vmatpush.msra.mxu0 0.0
  %971 = vmatpush.msra.mxu0 0.0
  %972 = vmatpush.msra.mxu0 0.0
  %973 = vmatpush.msra.mxu0 0.0
  %974 = vmatpush.msra.mxu0 %v44
  %975 = vmatpush.msra.mxu0 %v43
  %976 = vmatpush.msra.mxu0 %v42
  %977 = vmatpush.msra.mxu0 %v41
  %978 = vmatmul.f32.gmra.mxu0 %v960
  %v979 = vpop.f32.mrf.mxu0
  %v980 = vadd.f32 0.0, %v979
  %981 = vdwg.mxu0
  %v982 = vperm.slane %v64, 0
  %984 = vrot.lane.b32.xlu0 %v67, 96
  %v985 = vpop.permute.xlu0 %984
  %vm986 = vcmask 64512
  %v987 = vsel %vm986, %v985, 0
  %989 = vmatpush.msra.mxu0 0.0
  %990 = vmatpush.msra.mxu0 0.0
  %991 = vmatpush.msra.mxu0 0.0
  %992 = vmatpush.msra.mxu0 0.0
  %993 = vmatpush.msra.mxu0 0.0
  %994 = vmatpush.msra.mxu0 0.0
  %995 = vmatpush.msra.mxu0 0.0
  %996 = vmatpush.msra.mxu0 0.0
  %997 = vmatpush.msra.mxu0 0.0
  %998 = vmatpush.msra.mxu0 0.0
  %999 = vmatpush.msra.mxu0 0.0
  %1000 = vmatpush.msra.mxu0 0.0
  %1001 = vmatpush.msra.mxu0 0.0
  %1002 = vmatpush.msra.mxu0 0.0
  %1003 = vmatpush.msra.mxu0 0.0
  %1004 = vmatpush.msra.mxu0 %v980
  %1005 = vmatmul.f32.gmra.mxu0 %v987
  %v1006 = vpop.f32.mrf.mxu0
  %v1007 = vadd.f32 %v982, %v1006
  %1008 = vdwg.mxu0
  %v1009 = vmax.f32 %v1007, 0.0
  %v1011 = vsel %vm143, %v1009, 0
  %1013 = vmatpush.msra.mxu0 0.0
  %1014 = vmatpush.msra.mxu0 0.0
  %1015 = vmatpush.msra.mxu0 0.0
  %1016 = vmatpush.msra.mxu0 0.0
  %1017 = vmatpush.msra.mxu0 0.0
  %1018 = vmatpush.msra.mxu0 0.0
  %1019 = vmatpush.msra.mxu0 0.0
  %1020 = vmatpush.msra.mxu0 0.0
  %1021 = vmatpush.msra.mxu0 %v52
  %1022 = vmatpush.msra.mxu0 %v51
  %1023 = vmatpush.msra.mxu0 %v50
  %1024 = vmatpush.msra.mxu0 %v49
  %1025 = vmatpush.msra.mxu0 %v48
  %1026 = vmatpush.msra.mxu0 %v47
  %1027 = vmatpush.msra.mxu0 %v46
  %1028 = vmatpush.msra.mxu0 %v45
  %1029 = vmatmul.f32.gmra.mxu0 %v1011
  %v1030 = vpop.f32.mrf.mxu0
  %v1031 = vadd.f32 0.0, %v1030
  %1032 = vdwg.mxu0
  %v1033 = vperm.slane %v65, 0
  %1034 = vmatpush.msra.mxu0 0.0
  %1035 = vmatpush.msra.mxu0 0.0
  %1036 = vmatpush.msra.mxu0 0.0
  %1037 = vmatpush.msra.mxu0 0.0
  %1038 = vmatpush.msra.mxu0 0.0
  %1039 = vmatpush.msra.mxu0 0.0
  %1040 = vmatpush.msra.mxu0 0.0
  %1041 = vmatpush.msra.mxu0 0.0
  %1042 = vmatpush.msra.mxu0 0.0
  %1043 = vmatpush.msra.mxu0 0.0
  %1044 = vmatpush.msra.mxu0 0.0
  %1045 = vmatpush.msra.mxu0 0.0
  %1046 = vmatpush.msra.mxu0 0.0
  %1047 = vmatpush.msra.mxu0 0.0
  %1048 = vmatpush.msra.mxu0 0.0
  %1049 = vmatpush.msra.mxu0 %v1031
  %1050 = vmatmul.f32.gmra.mxu0 %v987
  %v1051 = vpop.f32.mrf.mxu0
  %v1052 = vadd.f32 %v1033, %v1051
  %1053 = vdwg.mxu0
  %v1054 = vmin.f32 %v1052, 10.0
  %v1055 = vmul.f32 %v1054, 2.0
  %v1056 = vadd.f32 %v1055, 1.0
  %v1057 = vmul.f32 %v1052, %v1052
  %1059 = vrot.lane.b32.xlu0 %v1057, 32
  %v1060 = vpop.permute.xlu0 %1059
  %v1062 = vsub.f32 %v1056, %v1060
  %v1063 = vmul.f32 %v1055, 1.442695
  %v1064 = vpow.pop %v1063
  %v1065 = vsub.f32 %v1062, %v1064
  %1067 = vrot.lane.b32.xlu0 %v1065, 96
  %v1068 = vpop.permute.xlu0 %1067
  %v1070 = vsel %vm210, %v1068, 0.0
  %1071 = vadd.xlane.f32.xlu0 %v1070
  %v1072 = vpop.xlane.xlu0 %1071
  %v1073 = vsel %vm582, %v1072, 0.0
  %1074 = vadd.xlane.f32.xlu0 %v1073
  %v1075 = vpop.xlane.xlu0 %1074
  %v1076 = vrot.slane %v1075, 4
  %v1077 = vadd.f32 %v1075, %v1076
  %v1078 = vrot.slane %v1077, 2
  %v1079 = vadd.f32 %v1077, %v1078
  %v1080 = vrot.slane %v1079, 1
  %v1081 = vadd.f32 %v1079, %v1080
  %s1082 = vtos %v1081
  %v1083 = vstv %s1082
  %v1084 = vmul.f32 %v1083, %v957
  %v1085 = vmul.f32 %v1084, -0.5
  %v1087 = vsel %vm210, %v1052, 0
  %1089 = vmatpush.msra.mxu0 0.0
  %1090 = vmatpush.msra.mxu0 0.0
  %1091 = vmatpush.msra.mxu0 0.0
  %1092 = vmatpush.msra.mxu0 0.0
  %1093 = vmatpush.msra.mxu0 0.0
  %1094 = vmatpush.msra.mxu0 0.0
  %1095 = vmatpush.msra.mxu0 0.0
  %1096 = vmatpush.msra.mxu0 0.0
  %1097 = vmatpush.msra.mxu0 0.0
  %1098 = vmatpush.msra.mxu0 0.0
  %1099 = vmatpush.msra.mxu0 0.0
  %1100 = vmatpush.msra.mxu0 0.0
  %1101 = vmatpush.msra.mxu0 %v60
  %1102 = vmatpush.msra.mxu0 %v59
  %1103 = vmatpush.msra.mxu0 %v58
  %1104 = vmatpush.msra.mxu0 %v57
  %1105 = vmatmul.f32.gmra.mxu0 %v1087
  %v1106 = vpop.f32.mrf.mxu0
  %v1107 = vadd.f32 0.0, %v1106
  %1108 = vdwg.mxu0
  %v1109 = vsel %vm210, %v67, 0
  %1111 = vmatpush.msra.mxu0 0.0
  %1112 = vmatpush.msra.mxu0 0.0
  %1113 = vmatpush.msra.mxu0 0.0
  %1114 = vmatpush.msra.mxu0 0.0
  %1115 = vmatpush.msra.mxu0 0.0
  %1116 = vmatpush.msra.mxu0 0.0
  %1117 = vmatpush.msra.mxu0 0.0
  %1118 = vmatpush.msra.mxu0 0.0
  %1119 = vmatpush.msra.mxu0 0.0
  %1120 = vmatpush.msra.mxu0 0.0
  %1121 = vmatpush.msra.mxu0 0.0
  %1122 = vmatpush.msra.mxu0 0.0
  %1123 = vmatpush.msra.mxu0 %v56
  %1124 = vmatpush.msra.mxu0 %v55
  %1125 = vmatpush.msra.mxu0 %v54
  %1126 = vmatpush.msra.mxu0 %v53
  %1127 = vmatmul.f32.gmra.mxu0 %v1109
  %v1128 = vpop.f32.mrf.mxu0
  %v1129 = vadd.f32 %v1107, %v1128
  %1130 = vdwg.mxu0
  %v1131 = vperm.slane %v66, 0
  %v1132 = vadd.f32 %v1129, %v1131
  %1134 = vrot.lane.b32.xlu0 %v1132, 64
  %v1135 = vpop.permute.xlu0 %1134
  %v1136 = vsel %vm143, %v1132, 0
  %v1138 = vsel %vm143, %v1135, 0
  %1140 = vmatpush.xpose.msra.mxu0 0.0
  %1141 = vmatpush.xpose.msra.mxu0 0.0
  %1142 = vmatpush.xpose.msra.mxu0 0.0
  %1143 = vmatpush.xpose.msra.mxu0 0.0
  %1144 = vmatpush.xpose.msra.mxu0 0.0
  %1145 = vmatpush.xpose.msra.mxu0 0.0
  %1146 = vmatpush.xpose.msra.mxu0 0.0
  %1147 = vmatpush.xpose.msra.mxu0 0.0
  %1148 = vmatpush.xpose.msra.mxu0 0.0
  %1149 = vmatpush.xpose.msra.mxu0 0.0
  %1150 = vmatpush.xpose.msra.mxu0 0.0
  %1151 = vmatpush.xpose.msra.mxu0 0.0
  %1152 = vmatpush.xpose.msra.mxu0 0.0
  %1153 = vmatpush.xpose.msra.mxu0 0.0
  %1154 = vmatpush.xpose.msra.mxu0 0.0
  %1155 = vmatpush.xpose.msra.mxu0 %v1138
  %1156 = vmatmul.f32.gmra.mxu0 %v1136
  %v1157 = vpop.f32.mrf.mxu0
  %v1158 = vadd.f32 0.0, %v1157
  %1159 = vdwg.mxu0
  %1160 = vrot.lane.b32.xlu0 %v67, 56
  %v1161 = vpop.permute.xlu0 %1160
  %v1164 = vsel %vm986, %v1158, 0
  %1166 = vmatpush.msra.mxu0 0.0
  %1167 = vmatpush.msra.mxu0 0.0
  %1168 = vmatpush.msra.mxu0 0.0
  %1169 = vmatpush.msra.mxu0 0.0
  %1170 = vmatpush.msra.mxu0 0.0
  %1171 = vmatpush.msra.mxu0 0.0
  %1172 = vmatpush.msra.mxu0 0.0
  %1173 = vmatpush.msra.mxu0 0.0
  %1174 = vmatpush.msra.mxu0 0.0
  %1175 = vmatpush.msra.mxu0 0.0
  %1176 = vmatpush.msra.mxu0 0.0
  %1177 = vmatpush.msra.mxu0 0.0
  %1178 = vmatpush.msra.mxu0 0.0
  %1179 = vmatpush.msra.mxu0 0.0
  %1180 = vmatpush.msra.mxu0 0.0
  %1181 = vmatpush.msra.mxu0 %v1161
  %1182 = vmatmul.f32.gmra.mxu0 %v1164
  %v1183 = vpop.f32.mrf.mxu0
  %v1184 = vadd.f32 0.0, %v1183
  %1185 = vdwg.mxu0
  %1187 = vrot.lane.b32.xlu0 %v1184, 40
  %v1188 = vpop.permute.xlu0 %1187
  %v1190 = vmul.f32 %v67, %v1188
  %vm1191 = vcmask 589120
  %v1192 = vsel %vm1191, %v1190, 0.0
  %v1193 = vrot.slane %v1192, 4
  %v1194 = vadd.f32 %v1192, %v1193
  %v1195 = vrot.slane %v1194, 2
  %v1196 = vadd.f32 %v1194, %v1195
  %v1197 = vrot.slane %v1196, 1
  %v1198 = vadd.f32 %v1196, %v1197
  %v1199 = vsub.f32 0.0, %v1198
  %v1200 = vmul.f32 %v1199, 1.442695
  %v1201 = vpow.pop %v1200
  %v1202 = vadd.f32 %v1201, 1.0
  %v1203 = vrcp.pop %v1202
  %v1204 = vmin.f32 %v1203, 1.0
  %v1205 = vadd.f32 %v1204, 1e-15
  %v1206 = vlog2.pop %v1205
  %v1207 = vmul.f32 %v1206, 0.6931472
  %1209 = vrot.lane.b32.xlu0 %v1207, 88
  %v1210 = vpop.permute.xlu0 %1209
  %vm1212 = vcmask 122880
  %v1213 = vsel %vm1212, %v1210, 0.0
  %1214 = vadd.xlane.f32.xlu0 %v1213
  %v1215 = vpop.xlane.xlu0 %1214
  %v1216 = vrot.slane %v1215, 4
  %v1217 = vadd.f32 %v1215, %v1216
  %v1218 = vrot.slane %v1217, 2
  %v1219 = vadd.f32 %v1217, %v1218
  %v1220 = vrot.slane %v1219, 1
  %v1221 = vadd.f32 %v1219, %v1220
  %s1222 = vtos %v1221
  %v1223 = vstv %s1222
  %v1224 = vrcp.pop 16.0
  %v1225 = vmul.f32 16.0, %v1224
  %v1226 = vsub.f32 1.0, %v1225
  %v1227 = vmul.f32 %v1224, %v1226
  %v1228 = vadd.f32 %v1224, %v1227
  %vm1229 = vweird.f32 %v1224
  %v1230 = vsel %vm1229, %v1224, %v1228
  %v1231 = vmul.f32 %v1223, %v1230
  %v1232 = vsub.f32 0.0, %v1231
  %v1233 = vsub.f32 1.0, %v1204
  %v1234 = vadd.f32 %v1233, 1e-15
  %v1235 = vlog2.pop %v1234
  %v1236 = vmul.f32 %v1235, 0.6931472
  %1238 = vrot.lane.b32.xlu0 %v1236, 72
  %v1239 = vpop.permute.xlu0 %1238
  %v1241 = vsel %vm1212, %v1239, 0.0
  %1242 = vadd.xlane.f32.xlu0 %v1241
  %v1243 = vpop.xlane.xlu0 %1242
  %v1244 = vrot.slane %v1243, 4
  %v1245 = vadd.f32 %v1243, %v1244
  %v1246 = vrot.slane %v1245, 2
  %v1247 = vadd.f32 %v1245, %v1246
  %v1248 = vrot.slane %v1247, 1
  %v1249 = vadd.f32 %v1247, %v1248
  %s1250 = vtos %v1249
  %v1251 = vstv %s1250
  %v1252 = vmul.f32 %v1251, %v1230
  %v1253 = vsub.f32 %v1232, %v1252
  %v1254 = vmul.f32 %v1085, %v957
  %v1255 = vadd.f32 %v1253, %v1254
  %1257 = vrot.lane.b32.xlu0 %v1204, 88
  %v1258 = vpop.permute.xlu0 %1257
  %v1260 = vsel %vm210, %v1258, %v1255
  %v1261 = vsel %vm868, %v1260, %v958
  %v1262 = vsel %vm877, %v1261, 0.0
  %1263 = vst [vmem:[%s4] sm:$0x1] %v1262
  // Predicated region
  $region18: #{dvgga_forward.1} parent=0 // pred_check
    _
  $region19: #{dvgga_forward.1} parent=0 // pred_check_branch
    %1265 = sbr.rel (0) target = $region21
  $region20: #{dvgga_forward.1} parent=0 // pred_region
    _
  $region21: #{dvgga_forward.1} parent=0 // pred_fallthru
    _
  // Predicated region
  $region22: #{dvgga_forward.1} parent=0 // pred_check
    _
  $region23: #{dvgga_forward.1} parent=0 // pred_check_branch
    %1267 = sbr.rel (0) target = $region25
  $region24: #{dvgga_forward.1} parent=0 // pred_region
    _
  $region25: #{dvgga_forward.1} parent=0 // pred_fallthru
    _

</llo_original>
